<compile_context>
chip_gen: v6e
topology: v6e:2x2x1
jax: 0.10.0
libtpu: 0.0.40
codegen_flags: <defaults>
</compile_context>

<pallas_src>
import functools
import math

import jax
import jax.numpy as jnp
from jax.experimental import pallas as pl
from jax.experimental.pallas import tpu as pltpu

LANE = 128
EPS = 1e-5
_GELU_C = 0.7978845608028654  # sqrt(2/pi)

# Conservative VMEM budget for tiling decisions: fits v7x's 64 MiB physical
# VMEM with headroom (v5e/v6e have 128 MiB).
_VMEM_BUDGET = 40 * 1024 * 1024


def _gelu_tanh(h):
    return 0.5 * h * (1.0 + jnp.tanh(_GELU_C * (h + 0.044715 * (h * h * h))))


def _round_up(n, m):
    return ((n + m - 1) // m) * m


# ----------------------------------------------------------------------------
# Kernel
# ----------------------------------------------------------------------------
def _resblock_kernel(x_ref, w_ref, b_ref, g_ref, beta_ref, o_ref,
                     sum_ref, sq_ref, *cache_refs,
                     batch, tb, eps, use_cache):
    p = pl.program_id(0)          # phase: 0 = stats (+ cache), 1 = epilogue
    i = pl.program_id(1)          # batch tile
    nb = pl.num_programs(1)

    def linear_gelu():
        x = x_ref[...]
        h = jnp.dot(x.astype(jnp.bfloat16), w_ref[...],
                    preferred_element_type=jnp.float32) + b_ref[...]
        return _gelu_tanh(h), x

    @pl.when(jnp.logical_and(p == 0, i == 0))
    def _():
        sum_ref[...] = jnp.zeros_like(sum_ref)
        sq_ref[...] = jnp.zeros_like(sq_ref)

    @pl.when(p == 0)
    def _():
        h, x = linear_gelu()
        if use_cache:
            h_cache, x_cache = cache_refs
            row0 = pl.multiple_of(i * tb, 8)
            h_cache[pl.ds(row0, tb), :] = h
            x_cache[pl.ds(row0, tb), :] = x
        # Mask padded / out-of-range rows out of the batch statistics.
        rows = jax.lax.broadcasted_iota(jnp.int32, (tb, 1), 0) + i * tb
        hm = jnp.where(rows < batch, h, 0.0)
        sum_ref[...] = sum_ref[...] + jnp.sum(hm, axis=0, keepdims=True)
        sq_ref[...] = sq_ref[...] + jnp.sum(hm * hm, axis=0, keepdims=True)

        @pl.when(i == nb - 1)
        def _():
            # Fold batch stats + BN affine into (scale, shift), reusing the
            # two scratch rows.
            inv_n = 1.0 / batch
            mean = sum_ref[...] * inv_n
            var = jnp.maximum(sq_ref[...] * inv_n - mean * mean, 0.0)
            inv_std = jax.lax.rsqrt(var + eps)
            scale = g_ref[...] * inv_std
            shift = beta_ref[...] - mean * scale
            sum_ref[...] = scale
            sq_ref[...] = shift

    @pl.when(p == 1)
    def _():
        if use_cache:
            h_cache, x_cache = cache_refs
            row0 = pl.multiple_of(i * tb, 8)
            h = h_cache[pl.ds(row0, tb), :]
            x = x_cache[pl.ds(row0, tb), :]
        else:
            h, x = linear_gelu()
        o_ref[...] = (h * sum_ref[...] + sq_ref[...] + x).astype(o_ref.dtype)


# ----------------------------------------------------------------------------
# Wrapper
# ----------------------------------------------------------------------------
def _pad_to(a, target, axis):
    pad = target - a.shape[axis]
    if pad == 0:
        return a
    widths = [(0, 0)] * a.ndim
    widths[axis] = (0, pad)
    return jnp.pad(a, widths)


@functools.partial(jax.jit, static_argnames=("single_buffer_residents",))
def _resblock_forward_impl(params, x, single_buffer_residents=True):
    B, F = x.shape
    Fp = _round_up(max(F, LANE), LANE)

    # VMEM footprint model (bytes).
    resident_bytes = Fp * Fp * 2 + 5 * 8 * Fp * 4      # W (bf16) + vectors + stats
    per_row_bytes = 2 * 2 * Fp * 4                     # x + out, f32, double-buffered

    # Batch tile: as large as the budget allows, then balanced across tiles so
    # the last tile is barely padded, rounded to 8 sublanes.
    tb_max = max(8, min(1024, (_VMEM_BUDGET - resident_bytes) // per_row_bytes))
    nb = max(1, math.ceil(B / tb_max))
    tb = _round_up(math.ceil(B / nb), 8)
    Bp = nb * tb

    # Cache h and x in VMEM when they fit: phase 1 then skips matmul, GELU and
    # the second HBM read of x.
    cache_bytes = 2 * Bp * Fp * 4
    use_cache = (resident_bytes + tb * per_row_bytes + cache_bytes) <= _VMEM_BUDGET

    xp = _pad_to(_pad_to(x.astype(jnp.float32), Fp, 1), Bp, 0)          # [Bp, Fp]
    wp = _pad_to(_pad_to(params["w"], Fp, 0), Fp, 1).astype(jnp.bfloat16)
    bp = _pad_to(params["b"].reshape(1, -1).astype(jnp.float32), Fp, 1)
    gp = _pad_to(params["gamma"].reshape(1, -1).astype(jnp.float32), Fp, 1)
    betap = _pad_to(params["beta"].reshape(1, -1).astype(jnp.float32), Fp, 1)

    kernel = functools.partial(_resblock_kernel, batch=B, tb=tb, eps=EPS,
                               use_cache=use_cache)

    # x: when cached, pin the block index during phase 1 (constant index =>
    # x only streamed from HBM once); otherwise re-read per tile in phase 1.
    if use_cache:
        x_spec = pl.BlockSpec((tb, Fp), lambda p, i: (i * (1 - p), 0))
    else:
        x_spec = pl.BlockSpec((tb, Fp), lambda p, i: (i, 0))

    # Output is only written in phase 1.  The block index is pinned at 0
    # during phase 0 so the never-written buffer is not flushed early; block 0
    # is fully rewritten at (p=1, i=0) before the index first changes.
    out_spec = pl.BlockSpec((tb, Fp), lambda p, i: (i * p, 0))

    # Constant-index residents; single-buffer them when supported (halves the
    # resident VMEM — matters for large Fp, especially on v7x's 64 MiB VMEM).
    if single_buffer_residents:
        def resident(shape):
            return pl.BlockSpec(shape, lambda p, i: (0, 0),
                                pipeline_mode=pl.Buffered(1))
    else:
        def resident(shape):
            return pl.BlockSpec(shape, lambda p, i: (0, 0))

    scratch_shapes = [pltpu.VMEM((1, Fp), jnp.float32),     # sum   -> scale
                      pltpu.VMEM((1, Fp), jnp.float32)]     # sumsq -> shift
    if use_cache:
        scratch_shapes += [pltpu.VMEM((Bp, Fp), jnp.float32),   # h cache
                           pltpu.VMEM((Bp, Fp), jnp.float32)]   # x cache

    footprint = resident_bytes + tb * per_row_bytes + (cache_bytes if use_cache else 0)
    vmem_limit = int(min(max(footprint * 5 // 4 + (4 << 20), 32 << 20), 96 << 20))

    yp = pl.pallas_call(
        kernel,
        out_shape=jax.ShapeDtypeStruct((Bp, Fp), jnp.float32),
        grid_spec=pltpu.PrefetchScalarGridSpec(
            num_scalar_prefetch=0,
            grid=(2, nb),
            in_specs=[
                x_spec,                   # x
                resident((Fp, Fp)),       # W^T (bf16), resident
                resident((1, Fp)),        # bias
                resident((1, Fp)),        # gamma
                resident((1, Fp)),        # beta
            ],
            out_specs=out_spec,
            scratch_shapes=scratch_shapes,
        ),
        compiler_params=pltpu.CompilerParams(
            # Batch statistics accumulate across batch tiles and are consumed
            # in phase 1 -> both grid axes must stay sequential.
            dimension_semantics=("arbitrary", "arbitrary"),
            vmem_limit_bytes=vmem_limit,
        ),
    )(xp, wp, bp, gp, betap)
    return yp[:B, :F]


def resblock_forward(params, x):
    try:
        return jax.block_until_ready(
            _resblock_forward_impl(params, x, single_buffer_residents=True))
    except Exception:
        # pl.Buffered(1) not accepted by this jax/libtpu combo: fall back to
        # default (double-buffered) resident specs.
        return _resblock_forward_impl(params, x, single_buffer_residents=False)


# ----------------------------------------------------------------------------
# Pure-JAX reference (same numerical recipe) for correctness
# ----------------------------------------------------------------------------
def resblock_ref(params, x, eps=EPS):
    w = params["w"].astype(jnp.bfloat16)
    h = jnp.dot(x.astype(jnp.bfloat16), w,
                preferred_element_type=jnp.float32) + params["b"][None, :]
    h = _gelu_tanh(h)
    mean = jnp.mean(h, axis=0, keepdims=True)
    var = jnp.maximum(jnp.mean(h * h, axis=0, keepdims=True) - mean * mean, 0.0)
    inv_std = jax.lax.rsqrt(var + eps)
    return (h - mean) * inv_std * params["gamma"][None, :] + params["beta"][None, :] + x


# ----------------------------------------------------------------------------
# Parameter init mimicking torch defaults
# ----------------------------------------------------------------------------
def init_resblock_params(key, features):
    kw, kb = jax.random.split(key)
    bound = 1.0 / math.sqrt(features)
    # Stored as [in, out] (= torch W^T) so the kernel does x @ W.
    w = jax.random.uniform(kw, (features, features), jnp.float32,
                           minval=-bound, maxval=bound)
    b = jax.random.uniform(kb, (features,), jnp.float32,
                           minval=-bound, maxval=bound)
    gamma = jnp.ones((features,), jnp.float32)   # BatchNorm1d default weight
    beta = jnp.zeros((features,), jnp.float32)   # BatchNorm1d default bias
    return {"w": w, "b": b, "gamma": gamma, "beta": beta}


if __name__ == "__main__":
    key = jax.random.PRNGKey(0)
    batch, features = 200, 96   # exercises feature padding (96 -> 128) and the
                                # balanced batch-tile / cache path.

    kp, kx = jax.random.split(key)
    params = init_resblock_params(kp, features)
    x = jax.random.normal(kx, (batch, features), jnp.float32)

    out = resblock_forward(params, x)
    out = jax.block_until_ready(out)

    ref = resblock_ref(params, x)
    assert out.shape == (batch, features), out.shape
    assert bool(jnp.all(jnp.isfinite(out))), "non-finite output"
    assert jnp.allclose(out, ref, atol=2e-3, rtol=2e-3), (
        "mismatch vs reference: max abs diff = "
        f"{float(jnp.max(jnp.abs(out - ref)))}")

    print("KERNEL_OK")
</pallas_src>

<mosaic_0001>
module attributes {stable_mosaic.version = 11 : i64} {
  func.func @_resblock_kernel(%arg0: i32, %arg1: i32, %arg2: memref<200x128xf32, #tpu.memory_space<vmem>>, %arg3: memref<128x128xbf16, #tpu.memory_space<vmem>>, %arg4: memref<1x128xf32, #tpu.memory_space<vmem>>, %arg5: memref<1x128xf32, #tpu.memory_space<vmem>>, %arg6: memref<1x128xf32, #tpu.memory_space<vmem>>, %arg7: memref<200x128xf32, #tpu.memory_space<vmem>>, %arg8: memref<1x128xf32, #tpu.memory_space<vmem>>, %arg9: memref<1x128xf32, #tpu.memory_space<vmem>>, %arg10: memref<200x128xf32, #tpu.memory_space<vmem>>, %arg11: memref<200x128xf32, #tpu.memory_space<vmem>>) attributes {dimension_semantics = [#tpu.dimension_semantics<arbitrary>, #tpu.dimension_semantics<arbitrary>], iteration_bounds = array<i64: 2, 1>, scalar_prefetch = 0 : i64, scratch_operands = 4 : i64, tpu.core_type = #tpu.core_type<tc>, window_params = [{transform_indices = @transform_0, window_bounds = array<i64: 200, 128>}, {pipeline_mode = #tpu.pipeline_mode<synchronous>, transform_indices = @transform_1, window_bounds = array<i64: 128, 128>}, {pipeline_mode = #tpu.pipeline_mode<synchronous>, transform_indices = @transform_2, window_bounds = array<i64: 1, 128>}, {pipeline_mode = #tpu.pipeline_mode<synchronous>, transform_indices = @transform_3, window_bounds = array<i64: 1, 128>}, {pipeline_mode = #tpu.pipeline_mode<synchronous>, transform_indices = @transform_4, window_bounds = array<i64: 1, 128>}, {transform_indices = @transform_5, window_bounds = array<i64: 200, 128>}]} {
    %c0_i32 = arith.constant 0 : i32
    %0 = arith.cmpi eq, %arg0, %c0_i32 : i32
    %c0_i32_0 = arith.constant 0 : i32
    %1 = arith.cmpi eq, %arg1, %c0_i32_0 : i32
    %2 = arith.andi %0, %1 : i1
    %3 = arith.extui %2 : i1 to i32
    %c0_i32_1 = arith.constant 0 : i32
    %4 = arith.cmpi ne, %3, %c0_i32_1 : i32
    scf.if %4 {
      %cst = arith.constant 0.000000e+00 : f32
      %11 = vector.broadcast %cst : f32 to vector<1x128xf32>
      %c0 = arith.constant 0 : index
      %c0_5 = arith.constant 0 : index
      %12 = vector.load %arg8[%c0, %c0_5] : memref<1x128xf32, #tpu.memory_space<vmem>>, vector<1x128xf32>
      tpu.vector_store %arg8[%c0, %c0_5], %11 {strides = array<i32>} : memref<1x128xf32, #tpu.memory_space<vmem>>, vector<1x128xf32>,
      %cst_6 = arith.constant 0.000000e+00 : f32
      %13 = vector.broadcast %cst_6 : f32 to vector<1x128xf32>
      %c0_7 = arith.constant 0 : index
      %c0_8 = arith.constant 0 : index
      %14 = vector.load %arg9[%c0_7, %c0_8] : memref<1x128xf32, #tpu.memory_space<vmem>>, vector<1x128xf32>
      tpu.vector_store %arg9[%c0_7, %c0_8], %13 {strides = array<i32>} : memref<1x128xf32, #tpu.memory_space<vmem>>, vector<1x128xf32>,
    } else {
    }
    %c0_i32_2 = arith.constant 0 : i32
    %5 = arith.cmpi eq, %arg0, %c0_i32_2 : i32
    %6 = arith.extui %5 : i1 to i32
    %c0_i32_3 = arith.constant 0 : i32
    %7 = arith.cmpi ne, %6, %c0_i32_3 : i32
    scf.if %7 {
      %c0 = arith.constant 0 : index
      %c0_5 = arith.constant 0 : index
      %11 = vector.load %arg2[%c0, %c0_5] : memref<200x128xf32, #tpu.memory_space<vmem>>, vector<200x128xf32>
      %12 = arith.truncf %11 : vector<200x128xf32> to vector<200x128xbf16>
      %c0_6 = arith.constant 0 : index
      %c0_7 = arith.constant 0 : index
      %13 = vector.load %arg3[%c0_6, %c0_7] : memref<128x128xbf16, #tpu.memory_space<vmem>>, vector<128x128xbf16>
      %cst = arith.constant dense<0.000000e+00> : vector<200x128xf32>
      %14 = tpu.matmul %12, %13, %cst {dimension_numbers = #tpu.dot_dimension_numbers<[1], [0], [0], [1], [0, 0, 1, 1], [], []>} : vector<200x128xbf16>, vector<128x128xbf16>, vector<200x128xf32> -> vector<200x128xf32>
      %c0_8 = arith.constant 0 : index
      %c0_9 = arith.constant 0 : index
      %15 = vector.load %arg4[%c0_8, %c0_9] : memref<1x128xf32, #tpu.memory_space<vmem>>, vector<1x128xf32>
      %16 = vector.broadcast %15 : vector<1x128xf32> to vector<200x128xf32>
      %17 = arith.addf %14, %16 : vector<200x128xf32>
      %cst_10 = arith.constant 5.000000e-01 : f32
      %18 = vector.broadcast %cst_10 : f32 to vector<200x128xf32>
      %19 = arith.mulf %18, %17 : vector<200x128xf32>
      %20 = arith.mulf %17, %17 : vector<200x128xf32>
      %21 = arith.mulf %20, %17 : vector<200x128xf32>
      %cst_11 = arith.constant 4.471500e-02 : f32
      %22 = vector.broadcast %cst_11 : f32 to vector<200x128xf32>
      %23 = arith.mulf %22, %21 : vector<200x128xf32>
      %24 = arith.addf %17, %23 : vector<200x128xf32>
      %cst_12 = arith.constant 0.797884583 : f32
      %25 = vector.broadcast %cst_12 : f32 to vector<200x128xf32>
      %26 = arith.mulf %25, %24 : vector<200x128xf32>
      %27 = math.tanh %26 : vector<200x128xf32>
      %cst_13 = arith.constant 1.000000e+00 : f32
      %28 = vector.broadcast %cst_13 : f32 to vector<200x128xf32>
      %29 = arith.addf %28, %27 : vector<200x128xf32>
      %30 = arith.mulf %19, %29 : vector<200x128xf32>
      %c200_i32 = arith.constant 200 : i32
      %31 = arith.muli %arg1, %c200_i32 : i32
      %32 = tpu.assume_multiple %31, 8 : i32
      %33 = arith.index_cast %32 : i32 to index
      %c0_14 = arith.constant 0 : index
      %34 = vector.load %arg10[%33, %c0_14] : memref<200x128xf32, #tpu.memory_space<vmem>>, vector<200x128xf32>
      tpu.vector_store %arg10[%33, %c0_14], %30 {strides = array<i32>} : memref<200x128xf32, #tpu.memory_space<vmem>>, vector<200x128xf32>,
      %35 = arith.index_cast %32 : i32 to index
      %c0_15 = arith.constant 0 : index
      %36 = vector.load %arg11[%35, %c0_15] : memref<200x128xf32, #tpu.memory_space<vmem>>, vector<200x128xf32>
      tpu.vector_store %arg11[%35, %c0_15], %11 {strides = array<i32>} : memref<200x128xf32, #tpu.memory_space<vmem>>, vector<200x128xf32>,
      %37 = tpu.iota {dimensions = array<i32: 0>} : vector<200x1xi32>
      %c200_i32_16 = arith.constant 200 : i32
      %38 = arith.muli %arg1, %c200_i32_16 : i32
      %39 = vector.broadcast %38 : i32 to vector<200x1xi32>
      %40 = arith.addi %37, %39 : vector<200x1xi32>
      %c200_i32_17 = arith.constant 200 : i32
      %41 = vector.broadcast %c200_i32_17 : i32 to vector<200x1xi32>
      %42 = arith.cmpi slt, %40, %41 : vector<200x1xi32>
      %cst_18 = arith.constant 0.000000e+00 : f32
      %43 = vector.shape_cast %42 : vector<200x1xi1> to vector<200x1xi1>
      %44 = vector.broadcast %43 : vector<200x1xi1> to vector<200x128xi1>
      %45 = vector.broadcast %cst_18 : f32 to vector<200x128xf32>
      %46 = arith.select %44, %30, %45 : vector<200x128xi1>, vector<200x128xf32>
      %c0_19 = arith.constant 0 : index
      %c0_20 = arith.constant 0 : index
      %47 = vector.load %arg8[%c0_19, %c0_20] : memref<1x128xf32, #tpu.memory_space<vmem>>, vector<1x128xf32>
      %cst_21 = arith.constant dense<0.000000e+00> : vector<128xf32>
      %48 = vector.multi_reduction <add>, %46, %cst_21 [0] : vector<200x128xf32> to vector<128xf32>
      %49 = vector.shape_cast %48 : vector<128xf32> to vector<1x128xf32>
      %50 = arith.addf %47, %49 : vector<1x128xf32>
      %c0_22 = arith.constant 0 : index
      %c0_23 = arith.constant 0 : index
      %51 = vector.load %arg8[%c0_22, %c0_23] : memref<1x128xf32, #tpu.memory_space<vmem>>, vector<1x128xf32>
      tpu.vector_store %arg8[%c0_22, %c0_23], %50 {strides = array<i32>} : memref<1x128xf32, #tpu.memory_space<vmem>>, vector<1x128xf32>,
      %c0_24 = arith.constant 0 : index
      %c0_25 = arith.constant 0 : index
      %52 = vector.load %arg9[%c0_24, %c0_25] : memref<1x128xf32, #tpu.memory_space<vmem>>, vector<1x128xf32>
      %53 = arith.mulf %46, %46 : vector<200x128xf32>
      %cst_26 = arith.constant dense<0.000000e+00> : vector<128xf32>
      %54 = vector.multi_reduction <add>, %53, %cst_26 [0] : vector<200x128xf32> to vector<128xf32>
      %55 = vector.shape_cast %54 : vector<128xf32> to vector<1x128xf32>
      %56 = arith.addf %52, %55 : vector<1x128xf32>
      %c0_27 = arith.constant 0 : index
      %c0_28 = arith.constant 0 : index
      %57 = vector.load %arg9[%c0_27, %c0_28] : memref<1x128xf32, #tpu.memory_space<vmem>>, vector<1x128xf32>
      tpu.vector_store %arg9[%c0_27, %c0_28], %56 {strides = array<i32>} : memref<1x128xf32, #tpu.memory_space<vmem>>, vector<1x128xf32>,
      %c0_i32_29 = arith.constant 0 : i32
      %58 = arith.cmpi eq, %arg1, %c0_i32_29 : i32
      %59 = arith.extui %58 : i1 to i32
      %c0_i32_30 = arith.constant 0 : i32
      %60 = arith.cmpi ne, %59, %c0_i32_30 : i32
      scf.if %60 {
        %c0_31 = arith.constant 0 : index
        %c0_32 = arith.constant 0 : index
        %61 = vector.load %arg8[%c0_31, %c0_32] : memref<1x128xf32, #tpu.memory_space<vmem>>, vector<1x128xf32>
        %cst_33 = arith.constant 5.000000e-03 : f32
        %62 = vector.broadcast %cst_33 : f32 to vector<1x128xf32>
        %63 = arith.mulf %61, %62 : vector<1x128xf32>
        %c0_34 = arith.constant 0 : index
        %c0_35 = arith.constant 0 : index
        %64 = vector.load %arg9[%c0_34, %c0_35] : memref<1x128xf32, #tpu.memory_space<vmem>>, vector<1x128xf32>
        %cst_36 = arith.constant 5.000000e-03 : f32
        %65 = vector.broadcast %cst_36 : f32 to vector<1x128xf32>
        %66 = arith.mulf %64, %65 : vector<1x128xf32>
        %67 = arith.mulf %63, %63 : vector<1x128xf32>
        %68 = arith.subf %66, %67 : vector<1x128xf32>
        %cst_37 = arith.constant 0.000000e+00 : f32
        %69 = vector.broadcast %cst_37 : f32 to vector<1x128xf32>
        %70 = arith.maximumf %68, %69 : vector<1x128xf32>
        %cst_38 = arith.constant 9.99999974E-6 : f32
        %71 = vector.broadcast %cst_38 : f32 to vector<1x128xf32>
        %72 = arith.addf %70, %71 : vector<1x128xf32>
        %73 = math.rsqrt %72 : vector<1x128xf32>
        %c0_39 = arith.constant 0 : index
        %c0_40 = arith.constant 0 : index
        %74 = vector.load %arg5[%c0_39, %c0_40] : memref<1x128xf32, #tpu.memory_space<vmem>>, vector<1x128xf32>
        %75 = arith.mulf %74, %73 : vector<1x128xf32>
        %c0_41 = arith.constant 0 : index
        %c0_42 = arith.constant 0 : index
        %76 = vector.load %arg6[%c0_41, %c0_42] : memref<1x128xf32, #tpu.memory_space<vmem>>, vector<1x128xf32>
        %77 = arith.mulf %63, %75 : vector<1x128xf32>
        %78 = arith.subf %76, %77 : vector<1x128xf32>
        %c0_43 = arith.constant 0 : index
        %c0_44 = arith.constant 0 : index
        %79 = vector.load %arg8[%c0_43, %c0_44] : memref<1x128xf32, #tpu.memory_space<vmem>>, vector<1x128xf32>
        tpu.vector_store %arg8[%c0_43, %c0_44], %75 {strides = array<i32>} : memref<1x128xf32, #tpu.memory_space<vmem>>, vector<1x128xf32>,
        %c0_45 = arith.constant 0 : index
        %c0_46 = arith.constant 0 : index
        %80 = vector.load %arg9[%c0_45, %c0_46] : memref<1x128xf32, #tpu.memory_space<vmem>>, vector<1x128xf32>
        tpu.vector_store %arg9[%c0_45, %c0_46], %78 {strides = array<i32>} : memref<1x128xf32, #tpu.memory_space<vmem>>, vector<1x128xf32>,
      } else {
      }
    } else {
    }
    %c1_i32 = arith.constant 1 : i32
    %8 = arith.cmpi eq, %arg0, %c1_i32 : i32
    %9 = arith.extui %8 : i1 to i32
    %c0_i32_4 = arith.constant 0 : i32
    %10 = arith.cmpi ne, %9, %c0_i32_4 : i32
    scf.if %10 {
      %c200_i32 = arith.constant 200 : i32
      %11 = arith.muli %arg1, %c200_i32 : i32
      %12 = tpu.assume_multiple %11, 8 : i32
      %13 = arith.index_cast %12 : i32 to index
      %c0 = arith.constant 0 : index
      %14 = vector.load %arg10[%13, %c0] : memref<200x128xf32, #tpu.memory_space<vmem>>, vector<200x128xf32>
      %15 = arith.index_cast %12 : i32 to index
      %c0_5 = arith.constant 0 : index
      %16 = vector.load %arg11[%15, %c0_5] : memref<200x128xf32, #tpu.memory_space<vmem>>, vector<200x128xf32>
      %c0_6 = arith.constant 0 : index
      %c0_7 = arith.constant 0 : index
      %17 = vector.load %arg8[%c0_6, %c0_7] : memref<1x128xf32, #tpu.memory_space<vmem>>, vector<1x128xf32>
      %18 = vector.broadcast %17 : vector<1x128xf32> to vector<200x128xf32>
      %19 = arith.mulf %14, %18 : vector<200x128xf32>
      %c0_8 = arith.constant 0 : index
      %c0_9 = arith.constant 0 : index
      %20 = vector.load %arg9[%c0_8, %c0_9] : memref<1x128xf32, #tpu.memory_space<vmem>>, vector<1x128xf32>
      %21 = vector.broadcast %20 : vector<1x128xf32> to vector<200x128xf32>
      %22 = arith.addf %19, %21 : vector<200x128xf32>
      %23 = arith.addf %22, %16 : vector<200x128xf32>
      %c0_10 = arith.constant 0 : index
      %c0_11 = arith.constant 0 : index
      %24 = vector.load %arg7[%c0_10, %c0_11] : memref<200x128xf32, #tpu.memory_space<vmem>>, vector<200x128xf32>
      tpu.vector_store %arg7[%c0_10, %c0_11], %23 {strides = array<i32>} : memref<200x128xf32, #tpu.memory_space<vmem>>, vector<200x128xf32>,
    } else {
    }
    return
  }
  func.func @transform_0(%arg0: i32, %arg1: i32) -> (i32, i32) {
    %c1_i32 = arith.constant 1 : i32
    %0 = arith.subi %c1_i32, %arg0 : i32
    %1 = arith.muli %arg1, %0 : i32
    %c0_i32 = arith.constant 0 : i32
    %c0_i32_0 = arith.constant 0 : i32
    return %1, %c0_i32 : i32, i32
  }
  func.func @transform_1(%arg0: i32, %arg1: i32) -> (i32, i32) {
    %c0_i32 = arith.constant 0 : i32
    %c0_i32_0 = arith.constant 0 : i32
    %c0_i32_1 = arith.constant 0 : i32
    return %c0_i32, %c0_i32_0 : i32, i32
  }
  func.func @transform_2(%arg0: i32, %arg1: i32) -> (i32, i32) {
    %c0_i32 = arith.constant 0 : i32
    %c0_i32_0 = arith.constant 0 : i32
    %c0_i32_1 = arith.constant 0 : i32
    return %c0_i32, %c0_i32_0 : i32, i32
  }
  func.func @transform_3(%arg0: i32, %arg1: i32) -> (i32, i32) {
    %c0_i32 = arith.constant 0 : i32
    %c0_i32_0 = arith.constant 0 : i32
    %c0_i32_1 = arith.constant 0 : i32
    return %c0_i32, %c0_i32_0 : i32, i32
  }
  func.func @transform_4(%arg0: i32, %arg1: i32) -> (i32, i32) {
    %c0_i32 = arith.constant 0 : i32
    %c0_i32_0 = arith.constant 0 : i32
    %c0_i32_1 = arith.constant 0 : i32
    return %c0_i32, %c0_i32_0 : i32, i32
  }
  func.func @transform_5(%arg0: i32, %arg1: i32) -> (i32, i32) {
    %0 = arith.muli %arg1, %arg0 : i32
    %c0_i32 = arith.constant 0 : i32
    %c0_i32_0 = arith.constant 0 : i32
    return %0, %c0_i32 : i32, i32
  }
}

module attributes {stable_mosaic.version = 11 : i64} {
  func.func @_resblock_kernel(%arg0: i32, %arg1: i32, %arg2: memref<200x128xf32, #tpu.memory_space<vmem>>, %arg3: memref<128x128xbf16, #tpu.memory_space<vmem>>, %arg4: memref<1x128xf32, #tpu.memory_space<vmem>>, %arg5: memref<1x128xf32, #tpu.memory_space<vmem>>, %arg6: memref<1x128xf32, #tpu.memory_space<vmem>>, %arg7: memref<200x128xf32, #tpu.memory_space<vmem>>, %arg8: memref<1x128xf32, #tpu.memory_space<vmem>>, %arg9: memref<1x128xf32, #tpu.memory_space<vmem>>, %arg10: memref<200x128xf32, #tpu.memory_space<vmem>>, %arg11: memref<200x128xf32, #tpu.memory_space<vmem>>) attributes {dimension_semantics = [#tpu.dimension_semantics<arbitrary>, #tpu.dimension_semantics<arbitrary>], iteration_bounds = array<i64: 2, 1>, scalar_prefetch = 0 : i64, scratch_operands = 4 : i64, tpu.core_type = #tpu.core_type<tc>, window_params = [{transform_indices = @transform_0, window_bounds = array<i64: 200, 128>}, {pipeline_mode = #tpu.pipeline_mode<synchronous>, transform_indices = @transform_1, window_bounds = array<i64: 128, 128>}, {pipeline_mode = #tpu.pipeline_mode<synchronous>, transform_indices = @transform_2, window_bounds = array<i64: 1, 128>}, {pipeline_mode = #tpu.pipeline_mode<synchronous>, transform_indices = @transform_3, window_bounds = array<i64: 1, 128>}, {pipeline_mode = #tpu.pipeline_mode<synchronous>, transform_indices = @transform_4, window_bounds = array<i64: 1, 128>}, {transform_indices = @transform_5, window_bounds = array<i64: 200, 128>}]} {
    %c0_i32 = arith.constant 0 : i32
    %0 = arith.cmpi eq, %arg0, %c0_i32 : i32
    %c0_i32_0 = arith.constant 0 : i32
    %1 = arith.cmpi eq, %arg1, %c0_i32_0 : i32
    %2 = arith.andi %0, %1 : i1
    %3 = arith.extui %2 : i1 to i32
    %c0_i32_1 = arith.constant 0 : i32
    %4 = arith.cmpi ne, %3, %c0_i32_1 : i32
    scf.if %4 {
      %cst = arith.constant 0.000000e+00 : f32
      %11 = vector.broadcast %cst : f32 to vector<1x128xf32>
      %c0 = arith.constant 0 : index
      %c0_5 = arith.constant 0 : index
      %12 = vector.load %arg8[%c0, %c0_5] : memref<1x128xf32, #tpu.memory_space<vmem>>, vector<1x128xf32>
      tpu.vector_store %arg8[%c0, %c0_5], %11 {strides = array<i32>} : memref<1x128xf32, #tpu.memory_space<vmem>>, vector<1x128xf32>,
      %cst_6 = arith.constant 0.000000e+00 : f32
      %13 = vector.broadcast %cst_6 : f32 to vector<1x128xf32>
      %c0_7 = arith.constant 0 : index
      %c0_8 = arith.constant 0 : index
      %14 = vector.load %arg9[%c0_7, %c0_8] : memref<1x128xf32, #tpu.memory_space<vmem>>, vector<1x128xf32>
      tpu.vector_store %arg9[%c0_7, %c0_8], %13 {strides = array<i32>} : memref<1x128xf32, #tpu.memory_space<vmem>>, vector<1x128xf32>,
    } else {
    }
    %c0_i32_2 = arith.constant 0 : i32
    %5 = arith.cmpi eq, %arg0, %c0_i32_2 : i32
    %6 = arith.extui %5 : i1 to i32
    %c0_i32_3 = arith.constant 0 : i32
    %7 = arith.cmpi ne, %6, %c0_i32_3 : i32
    scf.if %7 {
      %c0 = arith.constant 0 : index
      %c0_5 = arith.constant 0 : index
      %11 = vector.load %arg2[%c0, %c0_5] : memref<200x128xf32, #tpu.memory_space<vmem>>, vector<200x128xf32>
      %12 = arith.truncf %11 : vector<200x128xf32> to vector<200x128xbf16>
      %c0_6 = arith.constant 0 : index
      %c0_7 = arith.constant 0 : index
      %13 = vector.load %arg3[%c0_6, %c0_7] : memref<128x128xbf16, #tpu.memory_space<vmem>>, vector<128x128xbf16>
      %cst = arith.constant dense<0.000000e+00> : vector<200x128xf32>
      %14 = tpu.matmul %12, %13, %cst {dimension_numbers = #tpu.dot_dimension_numbers<[1], [0], [0], [1], [0, 0, 1, 1], [], []>} : vector<200x128xbf16>, vector<128x128xbf16>, vector<200x128xf32> -> vector<200x128xf32>
      %c0_8 = arith.constant 0 : index
      %c0_9 = arith.constant 0 : index
      %15 = vector.load %arg4[%c0_8, %c0_9] : memref<1x128xf32, #tpu.memory_space<vmem>>, vector<1x128xf32>
      %16 = vector.broadcast %15 : vector<1x128xf32> to vector<200x128xf32>
      %17 = arith.addf %14, %16 : vector<200x128xf32>
      %cst_10 = arith.constant 5.000000e-01 : f32
      %18 = vector.broadcast %cst_10 : f32 to vector<200x128xf32>
      %19 = arith.mulf %18, %17 : vector<200x128xf32>
      %20 = arith.mulf %17, %17 : vector<200x128xf32>
      %21 = arith.mulf %20, %17 : vector<200x128xf32>
      %cst_11 = arith.constant 4.471500e-02 : f32
      %22 = vector.broadcast %cst_11 : f32 to vector<200x128xf32>
      %23 = arith.mulf %22, %21 : vector<200x128xf32>
      %24 = arith.addf %17, %23 : vector<200x128xf32>
      %cst_12 = arith.constant 0.797884583 : f32
      %25 = vector.broadcast %cst_12 : f32 to vector<200x128xf32>
      %26 = arith.mulf %25, %24 : vector<200x128xf32>
      %27 = math.tanh %26 : vector<200x128xf32>
      %cst_13 = arith.constant 1.000000e+00 : f32
      %28 = vector.broadcast %cst_13 : f32 to vector<200x128xf32>
      %29 = arith.addf %28, %27 : vector<200x128xf32>
      %30 = arith.mulf %19, %29 : vector<200x128xf32>
      %c200_i32 = arith.constant 200 : i32
      %31 = arith.muli %arg1, %c200_i32 : i32
      %32 = tpu.assume_multiple %31, 8 : i32
      %33 = arith.index_cast %32 : i32 to index
      %c0_14 = arith.constant 0 : index
      %34 = vector.load %arg10[%33, %c0_14] : memref<200x128xf32, #tpu.memory_space<vmem>>, vector<200x128xf32>
      tpu.vector_store %arg10[%33, %c0_14], %30 {strides = array<i32>} : memref<200x128xf32, #tpu.memory_space<vmem>>, vector<200x128xf32>,
      %35 = arith.index_cast %32 : i32 to index
      %c0_15 = arith.constant 0 : index
      %36 = vector.load %arg11[%35, %c0_15] : memref<200x128xf32, #tpu.memory_space<vmem>>, vector<200x128xf32>
      tpu.vector_store %arg11[%35, %c0_15], %11 {strides = array<i32>} : memref<200x128xf32, #tpu.memory_space<vmem>>, vector<200x128xf32>,
      %37 = tpu.iota {dimensions = array<i32: 0>} : vector<200x1xi32>
      %c200_i32_16 = arith.constant 200 : i32
      %38 = arith.muli %arg1, %c200_i32_16 : i32
      %39 = vector.broadcast %38 : i32 to vector<200x1xi32>
      %40 = arith.addi %37, %39 : vector<200x1xi32>
      %c200_i32_17 = arith.constant 200 : i32
      %41 = vector.broadcast %c200_i32_17 : i32 to vector<200x1xi32>
      %42 = arith.cmpi slt, %40, %41 : vector<200x1xi32>
      %cst_18 = arith.constant 0.000000e+00 : f32
      %43 = vector.shape_cast %42 : vector<200x1xi1> to vector<200x1xi1>
      %44 = vector.broadcast %43 : vector<200x1xi1> to vector<200x128xi1>
      %45 = vector.broadcast %cst_18 : f32 to vector<200x128xf32>
      %46 = arith.select %44, %30, %45 : vector<200x128xi1>, vector<200x128xf32>
      %c0_19 = arith.constant 0 : index
      %c0_20 = arith.constant 0 : index
      %47 = vector.load %arg8[%c0_19, %c0_20] : memref<1x128xf32, #tpu.memory_space<vmem>>, vector<1x128xf32>
      %cst_21 = arith.constant dense<0.000000e+00> : vector<128xf32>
      %48 = vector.multi_reduction <add>, %46, %cst_21 [0] : vector<200x128xf32> to vector<128xf32>
      %49 = vector.shape_cast %48 : vector<128xf32> to vector<1x128xf32>
      %50 = arith.addf %47, %49 : vector<1x128xf32>
      %c0_22 = arith.constant 0 : index
      %c0_23 = arith.constant 0 : index
      %51 = vector.load %arg8[%c0_22, %c0_23] : memref<1x128xf32, #tpu.memory_space<vmem>>, vector<1x128xf32>
      tpu.vector_store %arg8[%c0_22, %c0_23], %50 {strides = array<i32>} : memref<1x128xf32, #tpu.memory_space<vmem>>, vector<1x128xf32>,
      %c0_24 = arith.constant 0 : index
      %c0_25 = arith.constant 0 : index
      %52 = vector.load %arg9[%c0_24, %c0_25] : memref<1x128xf32, #tpu.memory_space<vmem>>, vector<1x128xf32>
      %53 = arith.mulf %46, %46 : vector<200x128xf32>
      %cst_26 = arith.constant dense<0.000000e+00> : vector<128xf32>
      %54 = vector.multi_reduction <add>, %53, %cst_26 [0] : vector<200x128xf32> to vector<128xf32>
      %55 = vector.shape_cast %54 : vector<128xf32> to vector<1x128xf32>
      %56 = arith.addf %52, %55 : vector<1x128xf32>
      %c0_27 = arith.constant 0 : index
      %c0_28 = arith.constant 0 : index
      %57 = vector.load %arg9[%c0_27, %c0_28] : memref<1x128xf32, #tpu.memory_space<vmem>>, vector<1x128xf32>
      tpu.vector_store %arg9[%c0_27, %c0_28], %56 {strides = array<i32>} : memref<1x128xf32, #tpu.memory_space<vmem>>, vector<1x128xf32>,
      %c0_i32_29 = arith.constant 0 : i32
      %58 = arith.cmpi eq, %arg1, %c0_i32_29 : i32
      %59 = arith.extui %58 : i1 to i32
      %c0_i32_30 = arith.constant 0 : i32
      %60 = arith.cmpi ne, %59, %c0_i32_30 : i32
      scf.if %60 {
        %c0_31 = arith.constant 0 : index
        %c0_32 = arith.constant 0 : index
        %61 = vector.load %arg8[%c0_31, %c0_32] : memref<1x128xf32, #tpu.memory_space<vmem>>, vector<1x128xf32>
        %cst_33 = arith.constant 5.000000e-03 : f32
        %62 = vector.broadcast %cst_33 : f32 to vector<1x128xf32>
        %63 = arith.mulf %61, %62 : vector<1x128xf32>
        %c0_34 = arith.constant 0 : index
        %c0_35 = arith.constant 0 : index
        %64 = vector.load %arg9[%c0_34, %c0_35] : memref<1x128xf32, #tpu.memory_space<vmem>>, vector<1x128xf32>
        %cst_36 = arith.constant 5.000000e-03 : f32
        %65 = vector.broadcast %cst_36 : f32 to vector<1x128xf32>
        %66 = arith.mulf %64, %65 : vector<1x128xf32>
        %67 = arith.mulf %63, %63 : vector<1x128xf32>
        %68 = arith.subf %66, %67 : vector<1x128xf32>
        %cst_37 = arith.constant 0.000000e+00 : f32
        %69 = vector.broadcast %cst_37 : f32 to vector<1x128xf32>
        %70 = arith.maximumf %68, %69 : vector<1x128xf32>
        %cst_38 = arith.constant 9.99999974E-6 : f32
        %71 = vector.broadcast %cst_38 : f32 to vector<1x128xf32>
        %72 = arith.addf %70, %71 : vector<1x128xf32>
        %73 = math.rsqrt %72 : vector<1x128xf32>
        %c0_39 = arith.constant 0 : index
        %c0_40 = arith.constant 0 : index
        %74 = vector.load %arg5[%c0_39, %c0_40] : memref<1x128xf32, #tpu.memory_space<vmem>>, vector<1x128xf32>
        %75 = arith.mulf %74, %73 : vector<1x128xf32>
        %c0_41 = arith.constant 0 : index
        %c0_42 = arith.constant 0 : index
        %76 = vector.load %arg6[%c0_41, %c0_42] : memref<1x128xf32, #tpu.memory_space<vmem>>, vector<1x128xf32>
        %77 = arith.mulf %63, %75 : vector<1x128xf32>
        %78 = arith.subf %76, %77 : vector<1x128xf32>
        %c0_43 = arith.constant 0 : index
        %c0_44 = arith.constant 0 : index
        %79 = vector.load %arg8[%c0_43, %c0_44] : memref<1x128xf32, #tpu.memory_space<vmem>>, vector<1x128xf32>
        tpu.vector_store %arg8[%c0_43, %c0_44], %75 {strides = array<i32>} : memref<1x128xf32, #tpu.memory_space<vmem>>, vector<1x128xf32>,
        %c0_45 = arith.constant 0 : index
        %c0_46 = arith.constant 0 : index
        %80 = vector.load %arg9[%c0_45, %c0_46] : memref<1x128xf32, #tpu.memory_space<vmem>>, vector<1x128xf32>
        tpu.vector_store %arg9[%c0_45, %c0_46], %78 {strides = array<i32>} : memref<1x128xf32, #tpu.memory_space<vmem>>, vector<1x128xf32>,
      } else {
      }
    } else {
    }
    %c1_i32 = arith.constant 1 : i32
    %8 = arith.cmpi eq, %arg0, %c1_i32 : i32
    %9 = arith.extui %8 : i1 to i32
    %c0_i32_4 = arith.constant 0 : i32
    %10 = arith.cmpi ne, %9, %c0_i32_4 : i32
    scf.if %10 {
      %c200_i32 = arith.constant 200 : i32
      %11 = arith.muli %arg1, %c200_i32 : i32
      %12 = tpu.assume_multiple %11, 8 : i32
      %13 = arith.index_cast %12 : i32 to index
      %c0 = arith.constant 0 : index
      %14 = vector.load %arg10[%13, %c0] : memref<200x128xf32, #tpu.memory_space<vmem>>, vector<200x128xf32>
      %15 = arith.index_cast %12 : i32 to index
      %c0_5 = arith.constant 0 : index
      %16 = vector.load %arg11[%15, %c0_5] : memref<200x128xf32, #tpu.memory_space<vmem>>, vector<200x128xf32>
      %c0_6 = arith.constant 0 : index
      %c0_7 = arith.constant 0 : index
      %17 = vector.load %arg8[%c0_6, %c0_7] : memref<1x128xf32, #tpu.memory_space<vmem>>, vector<1x128xf32>
      %18 = vector.broadcast %17 : vector<1x128xf32> to vector<200x128xf32>
      %19 = arith.mulf %14, %18 : vector<200x128xf32>
      %c0_8 = arith.constant 0 : index
      %c0_9 = arith.constant 0 : index
      %20 = vector.load %arg9[%c0_8, %c0_9] : memref<1x128xf32, #tpu.memory_space<vmem>>, vector<1x128xf32>
      %21 = vector.broadcast %20 : vector<1x128xf32> to vector<200x128xf32>
      %22 = arith.addf %19, %21 : vector<200x128xf32>
      %23 = arith.addf %22, %16 : vector<200x128xf32>
      %c0_10 = arith.constant 0 : index
      %c0_11 = arith.constant 0 : index
      %24 = vector.load %arg7[%c0_10, %c0_11] : memref<200x128xf32, #tpu.memory_space<vmem>>, vector<200x128xf32>
      tpu.vector_store %arg7[%c0_10, %c0_11], %23 {strides = array<i32>} : memref<200x128xf32, #tpu.memory_space<vmem>>, vector<200x128xf32>,
    } else {
    }
    return
  }
  func.func @transform_0(%arg0: i32, %arg1: i32) -> (i32, i32) {
    %c1_i32 = arith.constant 1 : i32
    %0 = arith.subi %c1_i32, %arg0 : i32
    %1 = arith.muli %arg1, %0 : i32
    %c0_i32 = arith.constant 0 : i32
    %c0_i32_0 = arith.constant 0 : i32
    return %1, %c0_i32 : i32, i32
  }
  func.func @transform_1(%arg0: i32, %arg1: i32) -> (i32, i32) {
    %c0_i32 = arith.constant 0 : i32
    %c0_i32_0 = arith.constant 0 : i32
    %c0_i32_1 = arith.constant 0 : i32
    return %c0_i32, %c0_i32_0 : i32, i32
  }
  func.func @transform_2(%arg0: i32, %arg1: i32) -> (i32, i32) {
    %c0_i32 = arith.constant 0 : i32
    %c0_i32_0 = arith.constant 0 : i32
    %c0_i32_1 = arith.constant 0 : i32
    return %c0_i32, %c0_i32_0 : i32, i32
  }
  func.func @transform_3(%arg0: i32, %arg1: i32) -> (i32, i32) {
    %c0_i32 = arith.constant 0 : i32
    %c0_i32_0 = arith.constant 0 : i32
    %c0_i32_1 = arith.constant 0 : i32
    return %c0_i32, %c0_i32_0 : i32, i32
  }
  func.func @transform_4(%arg0: i32, %arg1: i32) -> (i32, i32) {
    %c0_i32 = arith.constant 0 : i32
    %c0_i32_0 = arith.constant 0 : i32
    %c0_i32_1 = arith.constant 0 : i32
    return %c0_i32, %c0_i32_0 : i32, i32
  }
  func.func @transform_5(%arg0: i32, %arg1: i32) -> (i32, i32) {
    %0 = arith.muli %arg1, %arg0 : i32
    %c0_i32 = arith.constant 0 : i32
    %c0_i32_0 = arith.constant 0 : i32
    return %0, %c0_i32 : i32, i32
  }
}

</mosaic_0001>

<llo_original>
// kernel: _resblock_forward_impl.1
$region0: #{_resblock_forward_impl.1}
  #allocation0 [shape = 'u32[]', space=smem, size = 0x4, offset = 0x4, fixed_abs, tag = 'smem constant byte address 0x4 - core index']
  #allocation1 [shape = 'u32[144,128]{1,0:T(1,128)}', space=vmem, size = 0x12000, scoped, tag = 'internal scratch']
  #allocation2 [shape = 'f32[1,128]{1,0:T(1,128)}', space=vmem, size = 0x200, scoped, tag = 'scratch operand']
  #allocation3 [shape = 'f32[1,128]{1,0:T(1,128)}', space=vmem, size = 0x200, scoped, tag = 'scratch operand']
  #allocation4 [shape = 'f32[200,128]{1,0:T(8,128)}', space=vmem, size = 0x19000, scoped, tag = 'scratch operand']
  #allocation5 [shape = 'f32[200,128]{1,0:T(8,128)}', space=vmem, size = 0x19000, scoped, tag = 'scratch operand']
  %s0 = inlined_call_operand.vmem [shape: f32[200,128], index: 0, kind: input, shape index: {}]
  %s1 = inlined_call_operand.vmem [shape: bf16[128,128], index: 1, kind: input, shape index: {}]
  %s2 = inlined_call_operand.vmem [shape: f32[1,128], index: 2, kind: input, shape index: {}]
  %s3 = inlined_call_operand.vmem [shape: f32[1,128], index: 3, kind: input, shape index: {}]
  %s4 = inlined_call_operand.vmem [shape: f32[1,128], index: 4, kind: input, shape index: {}]
  %s5 = inlined_call_operand.vmem [shape: f32[200,128], index: 5, kind: output, shape index: {}]
  %s6 = sld [smem:[#allocation0]]
  $region69: #{_resblock_forward_impl.1} parent=0
    _
  %s8 = ssub.s32 1, %s6
  %s9 = scalar_select 0, %s8, %s6
  loop: start=0, step=1, limit=4
  $region2: #{_resblock_forward_impl.1} parent=0 // loop_pre_header
    _
  $region3: #{_resblock_forward_impl.1} parent=0 // loop_header
    %s11 = sphi 0, %s15
    %p12 = scmp.ge.s32.totalorder %s11, 4
    %s18 = sphi 0, %s30
    %s19 = sphi 0, %s26
    %s20 = sphi 0, %s18
    %s21 = sphi 0, %s19
    %s22 = sphi 0, %s20
    %s23 = sphi 0, %s21
    %s37 = sphi 0, %s39
    %s40 = sphi 0, %s37
    %s41 = sphi 0, %s40
    %s57 = sphi 0, %s41
    %s61 = sphi 0, %s61
    %s63 = sphi 0, %s61
    %s64 = sphi 0, %s63
    %s78 = sphi 0, %s64
    %s82 = sphi 0, %s82
    %s84 = sphi 0, %s82
    %s85 = sphi 0, %s84
    %s99 = sphi 0, %s85
    %s103 = sphi 0, %s103
    %s105 = sphi 0, %s103
    %s106 = sphi 0, %s105
    %s120 = sphi 0, %s106
    %s124 = sphi 0, %s124
    %s126 = sphi 0, %s124
    %s127 = sphi 0, %s126
    %s141 = sphi 0, %s127
    %s149 = sphi 0, %s151
    %s152 = sphi 0, %s149
    %s153 = sphi 0, %s152
    %s169 = sphi 0, %s153
  $region4: #{_resblock_forward_impl.1} parent=0 // loop_header_branch
    %14 = sbr.rel (%p12) target = $region8
  $region5: #{_resblock_forward_impl.1} parent=0 // loop_body
    %s16 = ssub.s32 %s11, 1
    %s17 = ssub.s32 %s11, 2
    %s24 = sadd.s32 1, %s19
    %p25 = scmp.ge.s32.totalorder %s24, 1
    %s26 = scalar_select %p25, 0, %s24
    %s27 = sadd.s32 1, %s18
    %s28 = scalar_select %p25, %s27, %s18
    %p29 = scmp.ge.s32.totalorder %s28, 2
    %s30 = scalar_select %p29, 0, %s28
    %s31 = ssub.s32 1, %s18
    %s32 = smul.u32 %s19, %s31
    %s33 = ssub.s32 1, %s30
    %s34 = smul.u32 %s26, %s33
    %s35 = ssub.s32 %s32, %s34
    %p36 = scmp.eq.s32.totalorder %s35, 0
    %s38 = sadd.s32 %s37, 1
    %s39 = scalar_select %p36, %s37, %s38
    %p42 = pneg %p36
    %p43 = scmp.eq.s32.totalorder %s11, 1
    %p44 = por %p42, %p43
    %p45 = scmp.ne.s32.totalorder %s37, %s40
    %p46 = scmp.eq.s32.totalorder %s11, 0
    %p47 = por %p45, %p46
    %p48 = scmp.ne.s32.totalorder %s37, %s40
    %p49 = scmp.eq.s32.totalorder %s16, 1
    %p50 = por %p48, %p49
    %p51 = scmp.ne.s32.totalorder %s40, %s41
    %p52 = scmp.eq.s32.totalorder %s16, 0
    %p53 = por %p51, %p52
    %p54 = scmp.ne.s32.totalorder %s40, %s41
    %p55 = scmp.eq.s32.totalorder %s17, 1
    %p56 = por %p54, %p55
    %p58 = scmp.ne.s32.totalorder %s41, %s57
    %p59 = scmp.eq.s32.totalorder %s17, 0
    %p60 = por %p58, %p59
    %s62 = sadd.s32 %s61, 1
    %p65 = scmp.eq.s32.totalorder %s11, 1
    %p66 = scmp.ne.s32.totalorder %s61, %s63
    %p67 = scmp.eq.s32.totalorder %s11, 0
    %p68 = por %p66, %p67
    %p69 = scmp.ne.s32.totalorder %s61, %s63
    %p70 = scmp.eq.s32.totalorder %s16, 1
    %p71 = por %p69, %p70
    %p72 = scmp.ne.s32.totalorder %s63, %s64
    %p73 = scmp.eq.s32.totalorder %s16, 0
    %p74 = por %p72, %p73
    %p75 = scmp.ne.s32.totalorder %s63, %s64
    %p76 = scmp.eq.s32.totalorder %s17, 1
    %p77 = por %p75, %p76
    %p79 = scmp.ne.s32.totalorder %s64, %s78
    %p80 = scmp.eq.s32.totalorder %s17, 0
    %p81 = por %p79, %p80
    %s83 = sadd.s32 %s82, 1
    %p86 = scmp.eq.s32.totalorder %s11, 1
    %p87 = scmp.ne.s32.totalorder %s82, %s84
    %p88 = scmp.eq.s32.totalorder %s11, 0
    %p89 = por %p87, %p88
    %p90 = scmp.ne.s32.totalorder %s82, %s84
    %p91 = scmp.eq.s32.totalorder %s16, 1
    %p92 = por %p90, %p91
    %p93 = scmp.ne.s32.totalorder %s84, %s85
    %p94 = scmp.eq.s32.totalorder %s16, 0
    %p95 = por %p93, %p94
    %p96 = scmp.ne.s32.totalorder %s84, %s85
    %p97 = scmp.eq.s32.totalorder %s17, 1
    %p98 = por %p96, %p97
    %p100 = scmp.ne.s32.totalorder %s85, %s99
    %p101 = scmp.eq.s32.totalorder %s17, 0
    %p102 = por %p100, %p101
    %s104 = sadd.s32 %s103, 1
    %p107 = scmp.eq.s32.totalorder %s11, 1
    %p108 = scmp.ne.s32.totalorder %s103, %s105
    %p109 = scmp.eq.s32.totalorder %s11, 0
    %p110 = por %p108, %p109
    %p111 = scmp.ne.s32.totalorder %s103, %s105
    %p112 = scmp.eq.s32.totalorder %s16, 1
    %p113 = por %p111, %p112
    %p114 = scmp.ne.s32.totalorder %s105, %s106
    %p115 = scmp.eq.s32.totalorder %s16, 0
    %p116 = por %p114, %p115
    %p117 = scmp.ne.s32.totalorder %s105, %s106
    %p118 = scmp.eq.s32.totalorder %s17, 1
    %p119 = por %p117, %p118
    %p121 = scmp.ne.s32.totalorder %s106, %s120
    %p122 = scmp.eq.s32.totalorder %s17, 0
    %p123 = por %p121, %p122
    %s125 = sadd.s32 %s124, 1
    %p128 = scmp.eq.s32.totalorder %s11, 1
    %p129 = scmp.ne.s32.totalorder %s124, %s126
    %p130 = scmp.eq.s32.totalorder %s11, 0
    %p131 = por %p129, %p130
    %p132 = scmp.ne.s32.totalorder %s124, %s126
    %p133 = scmp.eq.s32.totalorder %s16, 1
    %p134 = por %p132, %p133
    %p135 = scmp.ne.s32.totalorder %s126, %s127
    %p136 = scmp.eq.s32.totalorder %s16, 0
    %p137 = por %p135, %p136
    %p138 = scmp.ne.s32.totalorder %s126, %s127
    %p139 = scmp.eq.s32.totalorder %s17, 1
    %p140 = por %p138, %p139
    %p142 = scmp.ne.s32.totalorder %s127, %s141
    %p143 = scmp.eq.s32.totalorder %s17, 0
    %p144 = por %p142, %p143
    %s145 = smul.u32 %s19, %s18
    %s146 = smul.u32 %s26, %s30
    %s147 = ssub.s32 %s145, %s146
    %p148 = scmp.eq.s32.totalorder %s147, 0
    %s150 = sadd.s32 %s149, 1
    %s151 = scalar_select %p148, %s149, %s150
    %p154 = pneg %p148
    %p155 = scmp.eq.s32.totalorder %s11, 1
    %p156 = por %p154, %p155
    %p157 = scmp.ne.s32.totalorder %s149, %s152
    %p158 = scmp.eq.s32.totalorder %s11, 0
    %p159 = por %p157, %p158
    %p160 = scmp.ne.s32.totalorder %s149, %s152
    %p161 = scmp.eq.s32.totalorder %s16, 1
    %p162 = por %p160, %p161
    %p163 = scmp.ne.s32.totalorder %s152, %s153
    %p164 = scmp.eq.s32.totalorder %s16, 0
    %p165 = por %p163, %p164
    %p166 = scmp.ne.s32.totalorder %s152, %s153
    %p167 = scmp.eq.s32.totalorder %s17, 1
    %p168 = por %p166, %p167
    %p170 = scmp.ne.s32.totalorder %s153, %s169
    %p171 = scmp.eq.s32.totalorder %s17, 0
    %p172 = por %p170, %p171
    %p173 = scmp.le.s32.totalorder 1, %s11
    %p174 = scmp.lt.s32.totalorder %s11, 3
    %p175 = pnand %p173, %p174
    %p176 = pneg %p175
    // Predicated region
    $region9: #{_resblock_forward_impl.1} parent=5 // pred_check
      _
    $region10: #{_resblock_forward_impl.1} parent=5 // pred_check_branch
      %178 = sbr.rel (%p175) target = $region12
    $region11: #{_resblock_forward_impl.1} parent=5 // pred_region
      %s179 = ssub.s32 %s11, 1
      // Predicated region
      $region13: #{_resblock_forward_impl.1} parent=11 // pred_check
        %p180 = pneg %p74
      $region14: #{_resblock_forward_impl.1} parent=11 // pred_check_branch
        %182 = sbr.rel (%p180) target = $region16
      $region15: #{_resblock_forward_impl.1} parent=11 // pred_region
        _
      $region16: #{_resblock_forward_impl.1} parent=11 // pred_fallthru
        _
      // Predicated region
      $region17: #{_resblock_forward_impl.1} parent=11 // pred_check
        %p183 = pneg %p95
      $region18: #{_resblock_forward_impl.1} parent=11 // pred_check_branch
        %185 = sbr.rel (%p183) target = $region20
      $region19: #{_resblock_forward_impl.1} parent=11 // pred_region
        _
      $region20: #{_resblock_forward_impl.1} parent=11 // pred_fallthru
        _
      // Predicated region
      $region21: #{_resblock_forward_impl.1} parent=11 // pred_check
        %p186 = pneg %p116
      $region22: #{_resblock_forward_impl.1} parent=11 // pred_check_branch
        %188 = sbr.rel (%p186) target = $region24
      $region23: #{_resblock_forward_impl.1} parent=11 // pred_region
        _
      $region24: #{_resblock_forward_impl.1} parent=11 // pred_fallthru
        _
      // Predicated region
      $region25: #{_resblock_forward_impl.1} parent=11 // pred_check
        %p189 = pneg %p137
      $region26: #{_resblock_forward_impl.1} parent=11 // pred_check_branch
        %191 = sbr.rel (%p189) target = $region28
      $region27: #{_resblock_forward_impl.1} parent=11 // pred_region
        _
      $region28: #{_resblock_forward_impl.1} parent=11 // pred_fallthru
        _
    $region12: #{_resblock_forward_impl.1} parent=5 // pred_fallthru
      _
    %p192 = scmp.lt.s32.totalorder %s11, 2
    // Predicated region
    $region29: #{_resblock_forward_impl.1} parent=5 // pred_check
      %p193 = pneg %p192
    $region30: #{_resblock_forward_impl.1} parent=5 // pred_check_branch
      %195 = sbr.rel (%p193) target = $region32
    $region31: #{_resblock_forward_impl.1} parent=5 // pred_region
      // Predicated region
      $region33: #{_resblock_forward_impl.1} parent=31 // pred_check
        %p196 = pneg %p47
      $region34: #{_resblock_forward_impl.1} parent=31 // pred_check_branch
        %198 = sbr.rel (%p196) target = $region36
      $region35: #{_resblock_forward_impl.1} parent=31 // pred_region
        %s199 = ssub.s32 1, %s18
        %s200 = smul.u32 %s19, %s199
        %s201 = smul.u32 25, %s200
        %p202 = scmp.lt.s32.totalorder %s201, 24
        %s203 = scalar_select %p202, %s201, 24
        %s204 = smul.addr %s203, 8
        %s205 = scalar_lea.vmem %s0, %s204
        %s206 = ssub.s32 1, %s18
        %s207 = smul.u32 %s19, %s206
        %s208 = smul.u32 25, %s207
      $region36: #{_resblock_forward_impl.1} parent=31 // pred_fallthru
        _
    $region32: #{_resblock_forward_impl.1} parent=5 // pred_fallthru
      _
    %p209 = scmp.le.s32.totalorder 1, %s11
    %p210 = scmp.lt.s32.totalorder %s11, 3
    %p211 = pnand %p209, %p210
    %p212 = pneg %p211
    // Predicated region
    $region37: #{_resblock_forward_impl.1} parent=5 // pred_check
      _
    $region38: #{_resblock_forward_impl.1} parent=5 // pred_check_branch
      %214 = sbr.rel (%p211) target = $region40
    $region39: #{_resblock_forward_impl.1} parent=5 // pred_region
      %s215 = ssub.s32 %s11, 1
      %s216 = ssub.s32 1, %s20
      %s217 = smul.u32 %s21, %s216
      %s218 = smul.u32 25, %s217
      %p219 = scmp.lt.s32.totalorder %s218, 24
      %s220 = scalar_select %p219, %s218, 24
      %s221 = smul.addr %s220, 8
      %s222 = scalar_lea.vmem %s0, %s221
      %p223 = pneg %p53
      %p224 = pneg %p50
      %p225 = pneg %p74
      %p226 = pneg %p71
      %p227 = pneg %p95
      %p228 = pneg %p92
      %p229 = pneg %p116
      %p230 = pneg %p113
      %p231 = pneg %p137
      %p232 = pneg %p134
      %p233 = pneg %p165
      %p234 = pneg %p162
      %s235 = smul.u32 %s21, %s20
      %s236 = smul.u32 25, %s235
      %p237 = scmp.lt.s32.totalorder %s236, 24
      %s238 = scalar_select %p237, %s236, 24
      %s239 = smul.addr %s238, 8
      %s240 = scalar_lea.vmem %s5, %s239
      %s241 = ssub.s32 1, %s20
      %s242 = smul.u32 %s21, %s241
      %s243 = smul.u32 25, %s242
      %p244 = scmp.lt.s32.totalorder %s243, 24
      %s245 = scalar_select %p244, %s243, 24
      %s246 = smul.addr %s245, 8
      %s247 = scalar_lea.vmem %s0, %s246
      %s248 = ssub.s32 1, %s20
      %s249 = smul.u32 %s21, %s248
      %s250 = smul.u32 25, %s249
      %s251 = smul.u32 %s21, %s20
      %s252 = smul.u32 25, %s251
      %p253 = scmp.lt.s32.totalorder %s252, 24
      %s254 = scalar_select %p253, %s252, 24
      %s255 = smul.addr %s254, 8
      %s256 = scalar_lea.vmem %s5, %s255
      %s257 = smul.u32 %s21, %s20
      %s258 = smul.u32 25, %s257
      %p260 = scmp.eq.s32.totalorder %s20, 0
      %p261 = scmp.eq.s32.totalorder %s21, 0
      %p262 = pnand %p260, %p261
      %p263 = pneg %p262
      // Predicated region
      $region41: #{_resblock_forward_impl.1} parent=39 // pred_check
        _
      $region42: #{_resblock_forward_impl.1} parent=39 // pred_check_branch
        %265 = sbr.rel (%p262) target = $region44
      $region43: #{_resblock_forward_impl.1} parent=39 // pred_region
        %266 = vst [vmem:[#allocation2] sm:$0x1] 0.0
        %267 = vst [vmem:[#allocation3] sm:$0x1] 0.0
      $region44: #{_resblock_forward_impl.1} parent=39 // pred_fallthru
        _
      // Predicated region
      $region45: #{_resblock_forward_impl.1} parent=39 // pred_check
        %p268 = pneg %p260
      $region46: #{_resblock_forward_impl.1} parent=39 // pred_check_branch
        %270 = sbr.rel (%p268) target = $region48
      $region47: #{_resblock_forward_impl.1} parent=39 // pred_region
        %v271 = vld [vmem:[%s247] sm:$0xff]
        %v272 = vld [vmem:[%s247 + $0x8] sm:$0xff]
        %v273 = vld [vmem:[%s247 + $0x10] sm:$0xff]
        %v274 = vld [vmem:[%s247 + $0x18] sm:$0xff]
        %v275 = vld [vmem:[%s247 + $0x20] sm:$0xff]
        %v276 = vld [vmem:[%s247 + $0x28] sm:$0xff]
        %v277 = vld [vmem:[%s247 + $0x30] sm:$0xff]
        %v278 = vld [vmem:[%s247 + $0x38] sm:$0xff]
        %v279 = vld [vmem:[%s247 + $0x40] sm:$0xff]
        %v280 = vld [vmem:[%s247 + $0x48] sm:$0xff]
        %v281 = vld [vmem:[%s247 + $0x50] sm:$0xff]
        %v282 = vld [vmem:[%s247 + $0x58] sm:$0xff]
        %v283 = vld [vmem:[%s247 + $0x60] sm:$0xff]
        %v284 = vld [vmem:[%s247 + $0x68] sm:$0xff]
        %v285 = vld [vmem:[%s247 + $0x70] sm:$0xff]
        %v286 = vld [vmem:[%s247 + $0x78] sm:$0xff]
        %v287 = vld [vmem:[%s247 + $0x80] sm:$0xff]
        %v288 = vld [vmem:[%s247 + $0x88] sm:$0xff]
        %v289 = vld [vmem:[%s247 + $0x90] sm:$0xff]
        %v290 = vld [vmem:[%s247 + $0x98] sm:$0xff]
        %v291 = vld [vmem:[%s247 + $0xa0] sm:$0xff]
        %v292 = vld [vmem:[%s247 + $0xa8] sm:$0xff]
        %v293 = vld [vmem:[%s247 + $0xb0] sm:$0xff]
        %v294 = vld [vmem:[%s247 + $0xb8] sm:$0xff]
        %v295 = vld [vmem:[%s247 + $0xc0] sm:$0xff]
        %v296 = vpack.c.bf16 %v272, %v271
        %v297 = vpack.c.bf16 %v274, %v273
        %v298 = vpack.c.bf16 %v276, %v275
        %v299 = vpack.c.bf16 %v278, %v277
        %v300 = vpack.c.bf16 %v280, %v279
        %v301 = vpack.c.bf16 %v282, %v281
        %v302 = vpack.c.bf16 %v284, %v283
        %v303 = vpack.c.bf16 %v286, %v285
        %v304 = vpack.c.bf16 %v288, %v287
        %v305 = vpack.c.bf16 %v290, %v289
        %v306 = vpack.c.bf16 %v292, %v291
        %v307 = vpack.c.bf16 %v294, %v293
        %v308 = vpack.c.bf16 %v295, %v295
        %v309 = vld [vmem:[%s1] sm:$0xf]
        %v310 = vld [vmem:[%s1 + $0x4] sm:$0xf]
        %v311 = vld [vmem:[%s1 + $0x8] sm:$0xf]
        %v312 = vld [vmem:[%s1 + $0xc] sm:$0xf]
        %v313 = vld [vmem:[%s1 + $0x10] sm:$0xf]
        %v314 = vld [vmem:[%s1 + $0x14] sm:$0xf]
        %v315 = vld [vmem:[%s1 + $0x18] sm:$0xf]
        %v316 = vld [vmem:[%s1 + $0x1c] sm:$0xf]
        %v317 = vld [vmem:[%s1 + $0x20] sm:$0xf]
        %v318 = vld [vmem:[%s1 + $0x24] sm:$0xf]
        %v319 = vld [vmem:[%s1 + $0x28] sm:$0xf]
        %v320 = vld [vmem:[%s1 + $0x2c] sm:$0xf]
        %v321 = vld [vmem:[%s1 + $0x30] sm:$0xf]
        %v322 = vld [vmem:[%s1 + $0x34] sm:$0xf]
        %v323 = vld [vmem:[%s1 + $0x38] sm:$0xf]
        %v324 = vld [vmem:[%s1 + $0x3c] sm:$0xf]
        %v325 = vld [vmem:[%s2] sm:$0x1]
        %v327 = vlaneseq
        %v328 = vshrl.u32 %v327, 7
        %v329 = vsub.s32 0, %v328
        %v330 = vrot.slane %v325, %v329
        %v348 = vunpack.c.l.b16 %v309
        %v349 = vunpack.c.l.b16 %v310
        %v350 = vunpack.c.l.b16 %v311
        %v351 = vunpack.c.l.b16 %v312
        %v352 = vunpack.c.l.b16 %v313
        %v353 = vunpack.c.l.b16 %v314
        %v354 = vunpack.c.l.b16 %v315
        %v355 = vunpack.c.l.b16 %v316
        %v356 = vunpack.c.l.b16 %v317
        %v357 = vunpack.c.l.b16 %v318
        %v358 = vunpack.c.l.b16 %v319
        %v359 = vunpack.c.l.b16 %v320
        %v360 = vunpack.c.l.b16 %v321
        %v361 = vunpack.c.l.b16 %v322
        %v362 = vunpack.c.l.b16 %v323
        %v363 = vunpack.c.l.b16 %v324
        %v364 = vpack.c.b16 %v349, %v348
        %v365 = vpack.c.b16 %v351, %v350
        %v366 = vpack.c.b16 %v353, %v352
        %v367 = vpack.c.b16 %v355, %v354
        %v368 = vpack.c.b16 %v357, %v356
        %v369 = vpack.c.b16 %v359, %v358
        %v370 = vpack.c.b16 %v361, %v360
        %v371 = vpack.c.b16 %v363, %v362
        %380 = vmatprep.subr.bf16.mxu0 0
        %381 = vmatpush1.bf16.msra.mxu0 %v371
        %382 = vmatprep.subr.bf16.mxu0 0
        %383 = vmatpush1.bf16.msra.mxu0 %v370
        %384 = vmatprep.subr.bf16.mxu0 0
        %385 = vmatpush1.bf16.msra.mxu0 %v369
        %386 = vmatprep.subr.bf16.mxu0 0
        %387 = vmatpush1.bf16.msra.mxu0 %v368
        %388 = vmatprep.subr.bf16.mxu0 0
        %389 = vmatpush1.bf16.msra.mxu0 %v367
        %390 = vmatprep.subr.bf16.mxu0 0
        %391 = vmatpush1.bf16.msra.mxu0 %v366
        %392 = vmatprep.subr.bf16.mxu0 0
        %393 = vmatpush1.bf16.msra.mxu0 %v365
        %394 = vmatprep.subr.bf16.mxu0 0
        %395 = vmatpush1.bf16.msra.mxu0 %v364
        %396 = vmatprep.subr.bf16.mxu0 0
        %397 = vmatpush2.bf16.msra.mxu0 0
        %398 = vmatprep.subr.bf16.mxu0 0
        %399 = vmatpush2.bf16.msra.mxu0 0
        %400 = vmatprep.subr.bf16.mxu0 0
        %401 = vmatpush2.bf16.msra.mxu0 0
        %402 = vmatprep.subr.bf16.mxu0 0
        %403 = vmatpush2.bf16.msra.mxu0 0
        %404 = vmatprep.subr.bf16.mxu0 0
        %405 = vmatpush2.bf16.msra.mxu0 0
        %406 = vmatprep.subr.bf16.mxu0 0
        %407 = vmatpush2.bf16.msra.mxu0 0
        %408 = vmatprep.subr.bf16.mxu0 0
        %409 = vmatpush2.bf16.msra.mxu0 0
        %410 = vmatprep.subr.bf16.mxu0 0
        %411 = vmatpush2.bf16.msra.mxu0 0
        %412 = vmatprep.mubr.bf16.mxu0 0
        %413 = vmatmul.mubr.bf16.gmra.mxu0 %v296
        %v414 = vpop.f32.mrf.mxu0
        %v415 = vadd.f32 %v330, %v414
        %v416 = vpop.f32.mrf.mxu0
        %v417 = vpop.f32.mrf.mxu0
        %v418 = vadd.f32 %v330, %v417
        %v419 = vpop.f32.mrf.mxu0
        %420 = vmatprep.mubr.bf16.mxu0 0
        %421 = vmatmul.mubr.bf16.gmra.mxu0 %v297
        %v422 = vpop.f32.mrf.mxu0
        %v423 = vadd.f32 %v330, %v422
        %v424 = vpop.f32.mrf.mxu0
        %v425 = vpop.f32.mrf.mxu0
        %v426 = vadd.f32 %v330, %v425
        %v427 = vpop.f32.mrf.mxu0
        %428 = vmatprep.mubr.bf16.mxu0 0
        %429 = vmatmul.mubr.bf16.gmra.mxu0 %v298
        %v430 = vpop.f32.mrf.mxu0
        %v431 = vadd.f32 %v330, %v430
        %v432 = vpop.f32.mrf.mxu0
        %v433 = vpop.f32.mrf.mxu0
        %v434 = vadd.f32 %v330, %v433
        %v435 = vpop.f32.mrf.mxu0
        %436 = vmatprep.mubr.bf16.mxu0 0
        %437 = vmatmul.mubr.bf16.gmra.mxu0 %v299
        %v438 = vpop.f32.mrf.mxu0
        %v439 = vadd.f32 %v330, %v438
        %v440 = vpop.f32.mrf.mxu0
        %v441 = vpop.f32.mrf.mxu0
        %v442 = vadd.f32 %v330, %v441
        %v443 = vpop.f32.mrf.mxu0
        %444 = vmatprep.mubr.bf16.mxu0 0
        %445 = vmatmul.mubr.bf16.gmra.mxu0 %v300
        %v446 = vpop.f32.mrf.mxu0
        %v447 = vadd.f32 %v330, %v446
        %v448 = vpop.f32.mrf.mxu0
        %v449 = vpop.f32.mrf.mxu0
        %v450 = vadd.f32 %v330, %v449
        %v451 = vpop.f32.mrf.mxu0
        %452 = vmatprep.mubr.bf16.mxu0 0
        %453 = vmatmul.mubr.bf16.gmra.mxu0 %v301
        %v454 = vpop.f32.mrf.mxu0
        %v455 = vadd.f32 %v330, %v454
        %v456 = vpop.f32.mrf.mxu0
        %v457 = vpop.f32.mrf.mxu0
        %v458 = vadd.f32 %v330, %v457
        %v459 = vpop.f32.mrf.mxu0
        %460 = vmatprep.mubr.bf16.mxu0 0
        %461 = vmatmul.mubr.bf16.gmra.mxu0 %v302
        %v462 = vpop.f32.mrf.mxu0
        %v463 = vadd.f32 %v330, %v462
        %v464 = vpop.f32.mrf.mxu0
        %v465 = vpop.f32.mrf.mxu0
        %v466 = vadd.f32 %v330, %v465
        %v467 = vpop.f32.mrf.mxu0
        %468 = vmatprep.mubr.bf16.mxu0 0
        %469 = vmatmul.mubr.bf16.gmra.mxu0 %v303
        %v470 = vpop.f32.mrf.mxu0
        %v471 = vadd.f32 %v330, %v470
        %v472 = vpop.f32.mrf.mxu0
        %v473 = vpop.f32.mrf.mxu0
        %v474 = vadd.f32 %v330, %v473
        %v475 = vpop.f32.mrf.mxu0
        %476 = vmatprep.mubr.bf16.mxu0 0
        %477 = vmatmul.mubr.bf16.gmra.mxu0 %v304
        %v478 = vpop.f32.mrf.mxu0
        %v479 = vadd.f32 %v330, %v478
        %v480 = vpop.f32.mrf.mxu0
        %v481 = vpop.f32.mrf.mxu0
        %v482 = vadd.f32 %v330, %v481
        %v483 = vpop.f32.mrf.mxu0
        %484 = vmatprep.mubr.bf16.mxu0 0
        %485 = vmatmul.mubr.bf16.gmra.mxu0 %v305
        %v486 = vpop.f32.mrf.mxu0
        %v487 = vadd.f32 %v330, %v486
        %v488 = vpop.f32.mrf.mxu0
        %v489 = vpop.f32.mrf.mxu0
        %v490 = vadd.f32 %v330, %v489
        %v491 = vpop.f32.mrf.mxu0
        %492 = vmatprep.mubr.bf16.mxu0 0
        %493 = vmatmul.mubr.bf16.gmra.mxu0 %v306
        %v494 = vpop.f32.mrf.mxu0
        %v495 = vadd.f32 %v330, %v494
        %v496 = vpop.f32.mrf.mxu0
        %v497 = vpop.f32.mrf.mxu0
        %v498 = vadd.f32 %v330, %v497
        %v499 = vpop.f32.mrf.mxu0
        %500 = vmatprep.mubr.bf16.mxu0 0
        %501 = vmatmul.mubr.bf16.gmra.mxu0 %v307
        %v502 = vpop.f32.mrf.mxu0
        %v503 = vadd.f32 %v330, %v502
        %v504 = vpop.f32.mrf.mxu0
        %v505 = vpop.f32.mrf.mxu0
        %v506 = vadd.f32 %v330, %v505
        %v507 = vpop.f32.mrf.mxu0
        %508 = vmatprep.mubr.bf16.mxu0 0
        %509 = vmatmul.mubr.bf16.gmra.mxu0 %v308
        %v510 = vpop.f32.mrf.mxu0
        %v511 = vadd.f32 %v330, %v510
        %v512 = vpop.f32.mrf.mxu0
        %v513 = vpop.f32.mrf.mxu0
        %v514 = vpop.f32.mrf.mxu0
        %515 = vdwg.mxu0
        %v516 = vmul.f32 %v415, 0.5
        %v517 = vmul.f32 %v418, 0.5
        %v518 = vmul.f32 %v423, 0.5
        %v519 = vmul.f32 %v426, 0.5
        %v520 = vmul.f32 %v431, 0.5
        %v521 = vmul.f32 %v434, 0.5
        %v522 = vmul.f32 %v439, 0.5
        %v523 = vmul.f32 %v442, 0.5
        %v524 = vmul.f32 %v447, 0.5
        %v525 = vmul.f32 %v450, 0.5
        %v526 = vmul.f32 %v455, 0.5
        %v527 = vmul.f32 %v458, 0.5
        %v528 = vmul.f32 %v463, 0.5
        %v529 = vmul.f32 %v466, 0.5
        %v530 = vmul.f32 %v471, 0.5
        %v531 = vmul.f32 %v474, 0.5
        %v532 = vmul.f32 %v479, 0.5
        %v533 = vmul.f32 %v482, 0.5
        %v534 = vmul.f32 %v487, 0.5
        %v535 = vmul.f32 %v490, 0.5
        %v536 = vmul.f32 %v495, 0.5
        %v537 = vmul.f32 %v498, 0.5
        %v538 = vmul.f32 %v503, 0.5
        %v539 = vmul.f32 %v506, 0.5
        %v540 = vmul.f32 %v511, 0.5
        %v541 = vmul.f32 %v415, %v415
        %v542 = vmul.f32 %v418, %v418
        %v543 = vmul.f32 %v423, %v423
        %v544 = vmul.f32 %v426, %v426
        %v545 = vmul.f32 %v431, %v431
        %v546 = vmul.f32 %v434, %v434
        %v547 = vmul.f32 %v439, %v439
        %v548 = vmul.f32 %v442, %v442
        %v549 = vmul.f32 %v447, %v447
        %v550 = vmul.f32 %v450, %v450
        %v551 = vmul.f32 %v455, %v455
        %v552 = vmul.f32 %v458, %v458
        %v553 = vmul.f32 %v463, %v463
        %v554 = vmul.f32 %v466, %v466
        %v555 = vmul.f32 %v471, %v471
        %v556 = vmul.f32 %v474, %v474
        %v557 = vmul.f32 %v479, %v479
        %v558 = vmul.f32 %v482, %v482
        %v559 = vmul.f32 %v487, %v487
        %v560 = vmul.f32 %v490, %v490
        %v561 = vmul.f32 %v495, %v495
        %v562 = vmul.f32 %v498, %v498
        %v563 = vmul.f32 %v503, %v503
        %v564 = vmul.f32 %v506, %v506
        %v565 = vmul.f32 %v511, %v511
        %v566 = vmul.f32 %v541, %v415
        %v567 = vmul.f32 %v542, %v418
        %v568 = vmul.f32 %v543, %v423
        %v569 = vmul.f32 %v544, %v426
        %v570 = vmul.f32 %v545, %v431
        %v571 = vmul.f32 %v546, %v434
        %v572 = vmul.f32 %v547, %v439
        %v573 = vmul.f32 %v548, %v442
        %v574 = vmul.f32 %v549, %v447
        %v575 = vmul.f32 %v550, %v450
        %v576 = vmul.f32 %v551, %v455
        %v577 = vmul.f32 %v552, %v458
        %v578 = vmul.f32 %v553, %v463
        %v579 = vmul.f32 %v554, %v466
        %v580 = vmul.f32 %v555, %v471
        %v581 = vmul.f32 %v556, %v474
        %v582 = vmul.f32 %v557, %v479
        %v583 = vmul.f32 %v558, %v482
        %v584 = vmul.f32 %v559, %v487
        %v585 = vmul.f32 %v560, %v490
        %v586 = vmul.f32 %v561, %v495
        %v587 = vmul.f32 %v562, %v498
        %v588 = vmul.f32 %v563, %v503
        %v589 = vmul.f32 %v564, %v506
        %v590 = vmul.f32 %v565, %v511
        %v591 = vmul.f32 %v566, 0.044715
        %v592 = vmul.f32 %v567, 0.044715
        %v593 = vmul.f32 %v568, 0.044715
        %v594 = vmul.f32 %v569, 0.044715
        %v595 = vmul.f32 %v570, 0.044715
        %v596 = vmul.f32 %v571, 0.044715
        %v597 = vmul.f32 %v572, 0.044715
        %v598 = vmul.f32 %v573, 0.044715
        %v599 = vmul.f32 %v574, 0.044715
        %v600 = vmul.f32 %v575, 0.044715
        %v601 = vmul.f32 %v576, 0.044715
        %v602 = vmul.f32 %v577, 0.044715
        %v603 = vmul.f32 %v578, 0.044715
        %v604 = vmul.f32 %v579, 0.044715
        %v605 = vmul.f32 %v580, 0.044715
        %v606 = vmul.f32 %v581, 0.044715
        %v607 = vmul.f32 %v582, 0.044715
        %v608 = vmul.f32 %v583, 0.044715
        %v609 = vmul.f32 %v584, 0.044715
        %v610 = vmul.f32 %v585, 0.044715
        %v611 = vmul.f32 %v586, 0.044715
        %v612 = vmul.f32 %v587, 0.044715
        %v613 = vmul.f32 %v588, 0.044715
        %v614 = vmul.f32 %v589, 0.044715
        %v615 = vmul.f32 %v590, 0.044715
        %v616 = vadd.f32 %v415, %v591
        %v617 = vadd.f32 %v418, %v592
        %v618 = vadd.f32 %v423, %v593
        %v619 = vadd.f32 %v426, %v594
        %v620 = vadd.f32 %v431, %v595
        %v621 = vadd.f32 %v434, %v596
        %v622 = vadd.f32 %v439, %v597
        %v623 = vadd.f32 %v442, %v598
        %v624 = vadd.f32 %v447, %v599
        %v625 = vadd.f32 %v450, %v600
        %v626 = vadd.f32 %v455, %v601
        %v627 = vadd.f32 %v458, %v602
        %v628 = vadd.f32 %v463, %v603
        %v629 = vadd.f32 %v466, %v604
        %v630 = vadd.f32 %v471, %v605
        %v631 = vadd.f32 %v474, %v606
        %v632 = vadd.f32 %v479, %v607
        %v633 = vadd.f32 %v482, %v608
        %v634 = vadd.f32 %v487, %v609
        %v635 = vadd.f32 %v490, %v610
        %v636 = vadd.f32 %v495, %v611
        %v637 = vadd.f32 %v498, %v612
        %v638 = vadd.f32 %v503, %v613
        %v639 = vadd.f32 %v506, %v614
        %v640 = vadd.f32 %v511, %v615
        %v641 = vmul.f32 %v616, 0.7978846
        %v642 = vmul.f32 %v617, 0.7978846
        %v643 = vmul.f32 %v618, 0.7978846
        %v644 = vmul.f32 %v619, 0.7978846
        %v645 = vmul.f32 %v620, 0.7978846
        %v646 = vmul.f32 %v621, 0.7978846
        %v647 = vmul.f32 %v622, 0.7978846
        %v648 = vmul.f32 %v623, 0.7978846
        %v649 = vmul.f32 %v624, 0.7978846
        %v650 = vmul.f32 %v625, 0.7978846
        %v651 = vmul.f32 %v626, 0.7978846
        %v652 = vmul.f32 %v627, 0.7978846
        %v653 = vmul.f32 %v628, 0.7978846
        %v654 = vmul.f32 %v629, 0.7978846
        %v655 = vmul.f32 %v630, 0.7978846
        %v656 = vmul.f32 %v631, 0.7978846
        %v657 = vmul.f32 %v632, 0.7978846
        %v658 = vmul.f32 %v633, 0.7978846
        %v659 = vmul.f32 %v634, 0.7978846
        %v660 = vmul.f32 %v635, 0.7978846
        %v661 = vmul.f32 %v636, 0.7978846
        %v662 = vmul.f32 %v637, 0.7978846
        %v663 = vmul.f32 %v638, 0.7978846
        %v664 = vmul.f32 %v639, 0.7978846
        %v665 = vmul.f32 %v640, 0.7978846
        %v666 = vtanh.pop %v641
        %v667 = vtanh.pop %v642
        %v668 = vtanh.pop %v643
        %v669 = vtanh.pop %v644
        %v670 = vtanh.pop %v645
        %v671 = vtanh.pop %v646
        %v672 = vtanh.pop %v647
        %v673 = vtanh.pop %v648
        %v674 = vtanh.pop %v649
        %v675 = vtanh.pop %v650
        %v676 = vtanh.pop %v651
        %v677 = vtanh.pop %v652
        %v678 = vtanh.pop %v653
        %v679 = vtanh.pop %v654
        %v680 = vtanh.pop %v655
        %v681 = vtanh.pop %v656
        %v682 = vtanh.pop %v657
        %v683 = vtanh.pop %v658
        %v684 = vtanh.pop %v659
        %v685 = vtanh.pop %v660
        %v686 = vtanh.pop %v661
        %v687 = vtanh.pop %v662
        %v688 = vtanh.pop %v663
        %v689 = vtanh.pop %v664
        %v690 = vtanh.pop %v665
        %v691 = vadd.f32 %v666, 1.0
        %v692 = vadd.f32 %v667, 1.0
        %v693 = vadd.f32 %v668, 1.0
        %v694 = vadd.f32 %v669, 1.0
        %v695 = vadd.f32 %v670, 1.0
        %v696 = vadd.f32 %v671, 1.0
        %v697 = vadd.f32 %v672, 1.0
        %v698 = vadd.f32 %v673, 1.0
        %v699 = vadd.f32 %v674, 1.0
        %v700 = vadd.f32 %v675, 1.0
        %v701 = vadd.f32 %v676, 1.0
        %v702 = vadd.f32 %v677, 1.0
        %v703 = vadd.f32 %v678, 1.0
        %v704 = vadd.f32 %v679, 1.0
        %v705 = vadd.f32 %v680, 1.0
        %v706 = vadd.f32 %v681, 1.0
        %v707 = vadd.f32 %v682, 1.0
        %v708 = vadd.f32 %v683, 1.0
        %v709 = vadd.f32 %v684, 1.0
        %v710 = vadd.f32 %v685, 1.0
        %v711 = vadd.f32 %v686, 1.0
        %v712 = vadd.f32 %v687, 1.0
        %v713 = vadd.f32 %v688, 1.0
        %v714 = vadd.f32 %v689, 1.0
        %v715 = vadd.f32 %v690, 1.0
        %v716 = vmul.f32 %v516, %v691
        %v717 = vmul.f32 %v517, %v692
        %v718 = vmul.f32 %v518, %v693
        %v719 = vmul.f32 %v519, %v694
        %v720 = vmul.f32 %v520, %v695
        %v721 = vmul.f32 %v521, %v696
        %v722 = vmul.f32 %v522, %v697
        %v723 = vmul.f32 %v523, %v698
        %v724 = vmul.f32 %v524, %v699
        %v725 = vmul.f32 %v525, %v700
        %v726 = vmul.f32 %v526, %v701
        %v727 = vmul.f32 %v527, %v702
        %v728 = vmul.f32 %v528, %v703
        %v729 = vmul.f32 %v529, %v704
        %v730 = vmul.f32 %v530, %v705
        %v731 = vmul.f32 %v531, %v706
        %v732 = vmul.f32 %v532, %v707
        %v733 = vmul.f32 %v533, %v708
        %v734 = vmul.f32 %v534, %v709
        %v735 = vmul.f32 %v535, %v710
        %v736 = vmul.f32 %v536, %v711
        %v737 = vmul.f32 %v537, %v712
        %v738 = vmul.f32 %v538, %v713
        %v739 = vmul.f32 %v539, %v714
        %v740 = vmul.f32 %v540, %v715
        %s741 = smul.u32 %s21, 200
        %s742 = scalar_lea.vmem [#allocation4], %s741
        %743 = vst [vmem:[%s742] sm:$0xff] %v716
        %744 = vst [vmem:[%s742 + $0x8] sm:$0xff] %v717
        %745 = vst [vmem:[%s742 + $0x10] sm:$0xff] %v718
        %746 = vst [vmem:[%s742 + $0x18] sm:$0xff] %v719
        %747 = vst [vmem:[%s742 + $0x20] sm:$0xff] %v720
        %748 = vst [vmem:[%s742 + $0x28] sm:$0xff] %v721
        %749 = vst [vmem:[%s742 + $0x30] sm:$0xff] %v722
        %750 = vst [vmem:[%s742 + $0x38] sm:$0xff] %v723
        %751 = vst [vmem:[%s742 + $0x40] sm:$0xff] %v724
        %752 = vst [vmem:[%s742 + $0x48] sm:$0xff] %v725
        %753 = vst [vmem:[%s742 + $0x50] sm:$0xff] %v726
        %754 = vst [vmem:[%s742 + $0x58] sm:$0xff] %v727
        %755 = vst [vmem:[%s742 + $0x60] sm:$0xff] %v728
        %756 = vst [vmem:[%s742 + $0x68] sm:$0xff] %v729
        %757 = vst [vmem:[%s742 + $0x70] sm:$0xff] %v730
        %758 = vst [vmem:[%s742 + $0x78] sm:$0xff] %v731
        %759 = vst [vmem:[%s742 + $0x80] sm:$0xff] %v732
        %760 = vst [vmem:[%s742 + $0x88] sm:$0xff] %v733
        %761 = vst [vmem:[%s742 + $0x90] sm:$0xff] %v734
        %762 = vst [vmem:[%s742 + $0x98] sm:$0xff] %v735
        %763 = vst [vmem:[%s742 + $0xa0] sm:$0xff] %v736
        %764 = vst [vmem:[%s742 + $0xa8] sm:$0xff] %v737
        %765 = vst [vmem:[%s742 + $0xb0] sm:$0xff] %v738
        %766 = vst [vmem:[%s742 + $0xb8] sm:$0xff] %v739
        %767 = vst [vmem:[%s742 + $0xc0] sm:$0xff] %v740
        %s768 = scalar_lea.vmem [#allocation5], %s741
        %769 = vst [vmem:[%s768] sm:$0xff] %v271
        %770 = vst [vmem:[%s768 + $0x8] sm:$0xff] %v272
        %771 = vst [vmem:[%s768 + $0x10] sm:$0xff] %v273
        %772 = vst [vmem:[%s768 + $0x18] sm:$0xff] %v274
        %773 = vst [vmem:[%s768 + $0x20] sm:$0xff] %v275
        %774 = vst [vmem:[%s768 + $0x28] sm:$0xff] %v276
        %775 = vst [vmem:[%s768 + $0x30] sm:$0xff] %v277
        %776 = vst [vmem:[%s768 + $0x38] sm:$0xff] %v278
        %777 = vst [vmem:[%s768 + $0x40] sm:$0xff] %v279
        %778 = vst [vmem:[%s768 + $0x48] sm:$0xff] %v280
        %779 = vst [vmem:[%s768 + $0x50] sm:$0xff] %v281
        %780 = vst [vmem:[%s768 + $0x58] sm:$0xff] %v282
        %781 = vst [vmem:[%s768 + $0x60] sm:$0xff] %v283
        %782 = vst [vmem:[%s768 + $0x68] sm:$0xff] %v284
        %783 = vst [vmem:[%s768 + $0x70] sm:$0xff] %v285
        %784 = vst [vmem:[%s768 + $0x78] sm:$0xff] %v286
        %785 = vst [vmem:[%s768 + $0x80] sm:$0xff] %v287
        %786 = vst [vmem:[%s768 + $0x88] sm:$0xff] %v288
        %787 = vst [vmem:[%s768 + $0x90] sm:$0xff] %v289
        %788 = vst [vmem:[%s768 + $0x98] sm:$0xff] %v290
        %789 = vst [vmem:[%s768 + $0xa0] sm:$0xff] %v291
        %790 = vst [vmem:[%s768 + $0xa8] sm:$0xff] %v292
        %791 = vst [vmem:[%s768 + $0xb0] sm:$0xff] %v293
        %792 = vst [vmem:[%s768 + $0xb8] sm:$0xff] %v294
        %793 = vst [vmem:[%s768 + $0xc0] sm:$0xff] %v295
        %v794 = vlaneseq
        %v795 = vshrl.u32 %v794, 7
        %v796 = vadd.s32 %v795, 8
        %v797 = vadd.s32 %v795, 16
        %v798 = vadd.s32 %v795, 24
        %v799 = vadd.s32 %v795, 32
        %v800 = vadd.s32 %v795, 40
        %v801 = vadd.s32 %v795, 48
        %v802 = vadd.s32 %v795, 56
        %v803 = vadd.s32 %v795, 64
        %v804 = vadd.s32 %v795, 72
        %v805 = vadd.s32 %v795, 80
        %v806 = vadd.s32 %v795, 88
        %v807 = vadd.s32 %v795, 96
        %v808 = vadd.s32 %v795, 104
        %v809 = vadd.s32 %v795, 112
        %v810 = vadd.s32 %v795, 120
        %v811 = vadd.s32 %v795, 128
        %v812 = vadd.s32 %v795, 136
        %v813 = vadd.s32 %v795, 144
        %v814 = vadd.s32 %v795, 152
        %v815 = vadd.s32 %v795, 160
        %v816 = vadd.s32 %v795, 168
        %v817 = vadd.s32 %v795, 176
        %v818 = vadd.s32 %v795, 184
        %v819 = vadd.s32 %v795, 192
        %v820 = vstv %s741
        %v821 = vadd.s32 %v795, %v820
        %v822 = vadd.s32 %v796, %v820
        %v823 = vadd.s32 %v797, %v820
        %v824 = vadd.s32 %v798, %v820
        %v825 = vadd.s32 %v799, %v820
        %v826 = vadd.s32 %v800, %v820
        %v827 = vadd.s32 %v801, %v820
        %v828 = vadd.s32 %v802, %v820
        %v829 = vadd.s32 %v803, %v820
        %v830 = vadd.s32 %v804, %v820
        %v831 = vadd.s32 %v805, %v820
        %v832 = vadd.s32 %v806, %v820
        %v833 = vadd.s32 %v807, %v820
        %v834 = vadd.s32 %v808, %v820
        %v835 = vadd.s32 %v809, %v820
        %v836 = vadd.s32 %v810, %v820
        %v837 = vadd.s32 %v811, %v820
        %v838 = vadd.s32 %v812, %v820
        %v839 = vadd.s32 %v813, %v820
        %v840 = vadd.s32 %v814, %v820
        %v841 = vadd.s32 %v815, %v820
        %v842 = vadd.s32 %v816, %v820
        %v843 = vadd.s32 %v817, %v820
        %v844 = vadd.s32 %v818, %v820
        %v845 = vadd.s32 %v819, %v820
        %vm846 = vcmp.lt.s32.totalorder %v821, 200
        %vm847 = vcmp.lt.s32.totalorder %v822, 200
        %vm848 = vcmp.lt.s32.totalorder %v823, 200
        %vm849 = vcmp.lt.s32.totalorder %v824, 200
        %vm850 = vcmp.lt.s32.totalorder %v825, 200
        %vm851 = vcmp.lt.s32.totalorder %v826, 200
        %vm852 = vcmp.lt.s32.totalorder %v827, 200
        %vm853 = vcmp.lt.s32.totalorder %v828, 200
        %vm854 = vcmp.lt.s32.totalorder %v829, 200
        %vm855 = vcmp.lt.s32.totalorder %v830, 200
        %vm856 = vcmp.lt.s32.totalorder %v831, 200
        %vm857 = vcmp.lt.s32.totalorder %v832, 200
        %vm858 = vcmp.lt.s32.totalorder %v833, 200
        %vm859 = vcmp.lt.s32.totalorder %v834, 200
        %vm860 = vcmp.lt.s32.totalorder %v835, 200
        %vm861 = vcmp.lt.s32.totalorder %v836, 200
        %vm862 = vcmp.lt.s32.totalorder %v837, 200
        %vm863 = vcmp.lt.s32.totalorder %v838, 200
        %vm864 = vcmp.lt.s32.totalorder %v839, 200
        %vm865 = vcmp.lt.s32.totalorder %v840, 200
        %vm866 = vcmp.lt.s32.totalorder %v841, 200
        %vm867 = vcmp.lt.s32.totalorder %v842, 200
        %vm868 = vcmp.lt.s32.totalorder %v843, 200
        %vm869 = vcmp.lt.s32.totalorder %v844, 200
        %vm870 = vcmp.lt.s32.totalorder %v845, 200
        %v871 = vsel %vm846, 1, 0
        %v872 = vsel %vm847, 1, 0
        %v873 = vsel %vm848, 1, 0
        %v874 = vsel %vm849, 1, 0
        %v875 = vsel %vm850, 1, 0
        %v876 = vsel %vm851, 1, 0
        %v877 = vsel %vm852, 1, 0
        %v878 = vsel %vm853, 1, 0
        %v879 = vsel %vm854, 1, 0
        %v880 = vsel %vm855, 1, 0
        %v881 = vsel %vm856, 1, 0
        %v882 = vsel %vm857, 1, 0
        %v883 = vsel %vm858, 1, 0
        %v884 = vsel %vm859, 1, 0
        %v885 = vsel %vm860, 1, 0
        %v886 = vsel %vm861, 1, 0
        %v887 = vsel %vm862, 1, 0
        %v888 = vsel %vm863, 1, 0
        %v889 = vsel %vm864, 1, 0
        %v890 = vsel %vm865, 1, 0
        %v891 = vsel %vm866, 1, 0
        %v892 = vsel %vm867, 1, 0
        %v893 = vsel %vm868, 1, 0
        %v894 = vsel %vm869, 1, 0
        %v895 = vsel %vm870, 1, 0
        %vm896 = vcmp.eq.s32.totalorder %v871, 1
        %vm897 = vcmp.eq.s32.totalorder %v872, 1
        %vm898 = vcmp.eq.s32.totalorder %v873, 1
        %vm899 = vcmp.eq.s32.totalorder %v874, 1
        %vm900 = vcmp.eq.s32.totalorder %v875, 1
        %vm901 = vcmp.eq.s32.totalorder %v876, 1
        %vm902 = vcmp.eq.s32.totalorder %v877, 1
        %vm903 = vcmp.eq.s32.totalorder %v878, 1
        %vm904 = vcmp.eq.s32.totalorder %v879, 1
        %vm905 = vcmp.eq.s32.totalorder %v880, 1
        %vm906 = vcmp.eq.s32.totalorder %v881, 1
        %vm907 = vcmp.eq.s32.totalorder %v882, 1
        %vm908 = vcmp.eq.s32.totalorder %v883, 1
        %vm909 = vcmp.eq.s32.totalorder %v884, 1
        %vm910 = vcmp.eq.s32.totalorder %v885, 1
        %vm911 = vcmp.eq.s32.totalorder %v886, 1
        %vm912 = vcmp.eq.s32.totalorder %v887, 1
        %vm913 = vcmp.eq.s32.totalorder %v888, 1
        %vm914 = vcmp.eq.s32.totalorder %v889, 1
        %vm915 = vcmp.eq.s32.totalorder %v890, 1
        %vm916 = vcmp.eq.s32.totalorder %v891, 1
        %vm917 = vcmp.eq.s32.totalorder %v892, 1
        %vm918 = vcmp.eq.s32.totalorder %v893, 1
        %vm919 = vcmp.eq.s32.totalorder %v894, 1
        %vm920 = vcmp.eq.s32.totalorder %v895, 1
        %v921 = vsel %vm896, %v716, 0.0
        %v922 = vsel %vm897, %v717, 0.0
        %v923 = vsel %vm898, %v718, 0.0
        %v924 = vsel %vm899, %v719, 0.0
        %v925 = vsel %vm900, %v720, 0.0
        %v926 = vsel %vm901, %v721, 0.0
        %v927 = vsel %vm902, %v722, 0.0
        %v928 = vsel %vm903, %v723, 0.0
        %v929 = vsel %vm904, %v724, 0.0
        %v930 = vsel %vm905, %v725, 0.0
        %v931 = vsel %vm906, %v726, 0.0
        %v932 = vsel %vm907, %v727, 0.0
        %v933 = vsel %vm908, %v728, 0.0
        %v934 = vsel %vm909, %v729, 0.0
        %v935 = vsel %vm910, %v730, 0.0
        %v936 = vsel %vm911, %v731, 0.0
        %v937 = vsel %vm912, %v732, 0.0
        %v938 = vsel %vm913, %v733, 0.0
        %v939 = vsel %vm914, %v734, 0.0
        %v940 = vsel %vm915, %v735, 0.0
        %v941 = vsel %vm916, %v736, 0.0
        %v942 = vsel %vm917, %v737, 0.0
        %v943 = vsel %vm918, %v738, 0.0
        %v944 = vsel %vm919, %v739, 0.0
        %v945 = vsel %vm920, %v740, 0.0
        %v946 = vld [vmem:[#allocation2] sm:$0x1]
        %v947 = vadd.f32 %v921, %v922
        %v948 = vadd.f32 %v947, %v923
        %v949 = vadd.f32 %v948, %v924
        %v950 = vadd.f32 %v949, %v925
        %v951 = vadd.f32 %v950, %v926
        %v952 = vadd.f32 %v951, %v927
        %v953 = vadd.f32 %v952, %v928
        %v954 = vadd.f32 %v953, %v929
        %v955 = vadd.f32 %v954, %v930
        %v956 = vadd.f32 %v955, %v931
        %v957 = vadd.f32 %v956, %v932
        %v958 = vadd.f32 %v957, %v933
        %v959 = vadd.f32 %v958, %v934
        %v960 = vadd.f32 %v959, %v935
        %v961 = vadd.f32 %v960, %v936
        %v962 = vadd.f32 %v961, %v937
        %v963 = vadd.f32 %v962, %v938
        %v964 = vadd.f32 %v963, %v939
        %v965 = vadd.f32 %v964, %v940
        %v966 = vadd.f32 %v965, %v941
        %v967 = vadd.f32 %v966, %v942
        %v968 = vadd.f32 %v967, %v943
        %v969 = vadd.f32 %v968, %v944
        %v970 = vadd.f32 %v969, %v945
        %v971 = vrot.slane %v970, 4
        %v972 = vadd.f32 %v970, %v971
        %v973 = vrot.slane %v972, 2
        %v974 = vadd.f32 %v972, %v973
        %v975 = vrot.slane %v974, 1
        %v976 = vadd.f32 %v974, %v975
        %v977 = vadd.f32 %v946, %v976
        %978 = vst [vmem:[#allocation2] sm:$0x1] %v977
        %v979 = vld [vmem:[#allocation3] sm:$0x1]
        %v980 = vmul.f32 %v921, %v921
        %v981 = vmul.f32 %v922, %v922
        %v982 = vmul.f32 %v923, %v923
        %v983 = vmul.f32 %v924, %v924
        %v984 = vmul.f32 %v925, %v925
        %v985 = vmul.f32 %v926, %v926
        %v986 = vmul.f32 %v927, %v927
        %v987 = vmul.f32 %v928, %v928
        %v988 = vmul.f32 %v929, %v929
        %v989 = vmul.f32 %v930, %v930
        %v990 = vmul.f32 %v931, %v931
        %v991 = vmul.f32 %v932, %v932
        %v992 = vmul.f32 %v933, %v933
        %v993 = vmul.f32 %v934, %v934
        %v994 = vmul.f32 %v935, %v935
        %v995 = vmul.f32 %v936, %v936
        %v996 = vmul.f32 %v937, %v937
        %v997 = vmul.f32 %v938, %v938
        %v998 = vmul.f32 %v939, %v939
        %v999 = vmul.f32 %v940, %v940
        %v1000 = vmul.f32 %v941, %v941
        %v1001 = vmul.f32 %v942, %v942
        %v1002 = vmul.f32 %v943, %v943
        %v1003 = vmul.f32 %v944, %v944
        %v1004 = vmul.f32 %v945, %v945
        %v1005 = vadd.f32 %v980, %v981
        %v1006 = vadd.f32 %v1005, %v982
        %v1007 = vadd.f32 %v1006, %v983
        %v1008 = vadd.f32 %v1007, %v984
        %v1009 = vadd.f32 %v1008, %v985
        %v1010 = vadd.f32 %v1009, %v986
        %v1011 = vadd.f32 %v1010, %v987
        %v1012 = vadd.f32 %v1011, %v988
        %v1013 = vadd.f32 %v1012, %v989
        %v1014 = vadd.f32 %v1013, %v990
        %v1015 = vadd.f32 %v1014, %v991
        %v1016 = vadd.f32 %v1015, %v992
        %v1017 = vadd.f32 %v1016, %v993
        %v1018 = vadd.f32 %v1017, %v994
        %v1019 = vadd.f32 %v1018, %v995
        %v1020 = vadd.f32 %v1019, %v996
        %v1021 = vadd.f32 %v1020, %v997
        %v1022 = vadd.f32 %v1021, %v998
        %v1023 = vadd.f32 %v1022, %v999
        %v1024 = vadd.f32 %v1023, %v1000
        %v1025 = vadd.f32 %v1024, %v1001
        %v1026 = vadd.f32 %v1025, %v1002
        %v1027 = vadd.f32 %v1026, %v1003
        %v1028 = vadd.f32 %v1027, %v1004
        %v1029 = vrot.slane %v1028, 4
        %v1030 = vadd.f32 %v1028, %v1029
        %v1031 = vrot.slane %v1030, 2
        %v1032 = vadd.f32 %v1030, %v1031
        %v1033 = vrot.slane %v1032, 1
        %v1034 = vadd.f32 %v1032, %v1033
        %v1035 = vadd.f32 %v979, %v1034
        %1036 = vst [vmem:[#allocation3] sm:$0x1] %v1035
        // Predicated region
        $region49: #{_resblock_forward_impl.1} parent=47 // pred_check
          %p1037 = pneg %p261
        $region50: #{_resblock_forward_impl.1} parent=47 // pred_check_branch
          %1039 = sbr.rel (%p1037) target = $region52
        $region51: #{_resblock_forward_impl.1} parent=47 // pred_region
          %v1040 = vld [vmem:[#allocation2] sm:$0x1]
          %v1041 = vmul.f32 %v1040, 0.005
          %v1042 = vld [vmem:[#allocation3] sm:$0x1]
          %v1043 = vmul.f32 %v1042, 0.005
          %v1044 = vmul.f32 %v1041, %v1041
          %v1045 = vsub.f32 %v1043, %v1044
          %v1046 = vmax.f32 %v1045, 0.0
          %v1047 = vadd.f32 %v1046, 1e-05
          %v1048 = vrsqrt.pop %v1047
          %v1049 = vld [vmem:[%s3] sm:$0x1]
          %v1050 = vmul.f32 %v1049, %v1048
          %v1051 = vld [vmem:[%s4] sm:$0x1]
          %v1052 = vmul.f32 %v1041, %v1050
          %v1053 = vsub.f32 %v1051, %v1052
          %1054 = vst [vmem:[#allocation2] sm:$0x1] %v1050
          %1055 = vst [vmem:[#allocation3] sm:$0x1] %v1053
        $region52: #{_resblock_forward_impl.1} parent=47 // pred_fallthru
          _
      $region48: #{_resblock_forward_impl.1} parent=39 // pred_fallthru
        _
      %p1056 = scmp.eq.s32.totalorder %s20, 1
      // Predicated region
      $region53: #{_resblock_forward_impl.1} parent=39 // pred_check
        %p1057 = pneg %p1056
      $region54: #{_resblock_forward_impl.1} parent=39 // pred_check_branch
        %1059 = sbr.rel (%p1057) target = $region56
      $region55: #{_resblock_forward_impl.1} parent=39 // pred_region
        %s1060 = smul.u32 %s21, 200
        %s1061 = scalar_lea.vmem [#allocation4], %s1060
        %v1062 = vld [vmem:[%s1061] sm:$0xff]
        %v1063 = vld [vmem:[%s1061 + $0x8] sm:$0xff]
        %v1064 = vld [vmem:[%s1061 + $0x10] sm:$0xff]
        %v1065 = vld [vmem:[%s1061 + $0x18] sm:$0xff]
        %v1066 = vld [vmem:[%s1061 + $0x20] sm:$0xff]
        %v1067 = vld [vmem:[%s1061 + $0x28] sm:$0xff]
        %v1068 = vld [vmem:[%s1061 + $0x30] sm:$0xff]
        %v1069 = vld [vmem:[%s1061 + $0x38] sm:$0xff]
        %v1070 = vld [vmem:[%s1061 + $0x40] sm:$0xff]
        %v1071 = vld [vmem:[%s1061 + $0x48] sm:$0xff]
        %v1072 = vld [vmem:[%s1061 + $0x50] sm:$0xff]
        %v1073 = vld [vmem:[%s1061 + $0x58] sm:$0xff]
        %v1074 = vld [vmem:[%s1061 + $0x60] sm:$0xff]
        %v1075 = vld [vmem:[%s1061 + $0x68] sm:$0xff]
        %v1076 = vld [vmem:[%s1061 + $0x70] sm:$0xff]
        %v1077 = vld [vmem:[%s1061 + $0x78] sm:$0xff]
        %v1078 = vld [vmem:[%s1061 + $0x80] sm:$0xff]
        %v1079 = vld [vmem:[%s1061 + $0x88] sm:$0xff]
        %v1080 = vld [vmem:[%s1061 + $0x90] sm:$0xff]
        %v1081 = vld [vmem:[%s1061 + $0x98] sm:$0xff]
        %v1082 = vld [vmem:[%s1061 + $0xa0] sm:$0xff]
        %v1083 = vld [vmem:[%s1061 + $0xa8] sm:$0xff]
        %v1084 = vld [vmem:[%s1061 + $0xb0] sm:$0xff]
        %v1085 = vld [vmem:[%s1061 + $0xb8] sm:$0xff]
        %v1086 = vld [vmem:[%s1061 + $0xc0] sm:$0xff]
        %s1087 = scalar_lea.vmem [#allocation5], %s1060
        %v1088 = vld [vmem:[%s1087] sm:$0xff]
        %v1089 = vld [vmem:[%s1087 + $0x8] sm:$0xff]
        %v1090 = vld [vmem:[%s1087 + $0x10] sm:$0xff]
        %v1091 = vld [vmem:[%s1087 + $0x18] sm:$0xff]
        %v1092 = vld [vmem:[%s1087 + $0x20] sm:$0xff]
        %v1093 = vld [vmem:[%s1087 + $0x28] sm:$0xff]
        %v1094 = vld [vmem:[%s1087 + $0x30] sm:$0xff]
        %v1095 = vld [vmem:[%s1087 + $0x38] sm:$0xff]
        %v1096 = vld [vmem:[%s1087 + $0x40] sm:$0xff]
        %v1097 = vld [vmem:[%s1087 + $0x48] sm:$0xff]
        %v1098 = vld [vmem:[%s1087 + $0x50] sm:$0xff]
        %v1099 = vld [vmem:[%s1087 + $0x58] sm:$0xff]
        %v1100 = vld [vmem:[%s1087 + $0x60] sm:$0xff]
        %v1101 = vld [vmem:[%s1087 + $0x68] sm:$0xff]
        %v1102 = vld [vmem:[%s1087 + $0x70] sm:$0xff]
        %v1103 = vld [vmem:[%s1087 + $0x78] sm:$0xff]
        %v1104 = vld [vmem:[%s1087 + $0x80] sm:$0xff]
        %v1105 = vld [vmem:[%s1087 + $0x88] sm:$0xff]
        %v1106 = vld [vmem:[%s1087 + $0x90] sm:$0xff]
        %v1107 = vld [vmem:[%s1087 + $0x98] sm:$0xff]
        %v1108 = vld [vmem:[%s1087 + $0xa0] sm:$0xff]
        %v1109 = vld [vmem:[%s1087 + $0xa8] sm:$0xff]
        %v1110 = vld [vmem:[%s1087 + $0xb0] sm:$0xff]
        %v1111 = vld [vmem:[%s1087 + $0xb8] sm:$0xff]
        %v1112 = vld [vmem:[%s1087 + $0xc0] sm:$0xff]
        %v1113 = vld [vmem:[#allocation2] sm:$0x1]
        %v1115 = vlaneseq
        %v1116 = vshrl.u32 %v1115, 7
        %v1117 = vsub.s32 0, %v1116
        %v1118 = vrot.slane %v1113, %v1117
        %v1120 = vmul.f32 %v1062, %v1118
        %v1121 = vmul.f32 %v1063, %v1118
        %v1122 = vmul.f32 %v1064, %v1118
        %v1123 = vmul.f32 %v1065, %v1118
        %v1124 = vmul.f32 %v1066, %v1118
        %v1125 = vmul.f32 %v1067, %v1118
        %v1126 = vmul.f32 %v1068, %v1118
        %v1127 = vmul.f32 %v1069, %v1118
        %v1128 = vmul.f32 %v1070, %v1118
        %v1129 = vmul.f32 %v1071, %v1118
        %v1130 = vmul.f32 %v1072, %v1118
        %v1131 = vmul.f32 %v1073, %v1118
        %v1132 = vmul.f32 %v1074, %v1118
        %v1133 = vmul.f32 %v1075, %v1118
        %v1134 = vmul.f32 %v1076, %v1118
        %v1135 = vmul.f32 %v1077, %v1118
        %v1136 = vmul.f32 %v1078, %v1118
        %v1137 = vmul.f32 %v1079, %v1118
        %v1138 = vmul.f32 %v1080, %v1118
        %v1139 = vmul.f32 %v1081, %v1118
        %v1140 = vmul.f32 %v1082, %v1118
        %v1141 = vmul.f32 %v1083, %v1118
        %v1142 = vmul.f32 %v1084, %v1118
        %v1143 = vmul.f32 %v1085, %v1118
        %v1144 = vmul.f32 %v1086, %v1118
        %v1145 = vld [vmem:[#allocation3] sm:$0x1]
        %v1147 = vlaneseq
        %v1148 = vshrl.u32 %v1147, 7
        %v1149 = vsub.s32 0, %v1148
        %v1150 = vrot.slane %v1145, %v1149
        %v1152 = vadd.f32 %v1120, %v1150
        %v1153 = vadd.f32 %v1121, %v1150
        %v1154 = vadd.f32 %v1122, %v1150
        %v1155 = vadd.f32 %v1123, %v1150
        %v1156 = vadd.f32 %v1124, %v1150
        %v1157 = vadd.f32 %v1125, %v1150
        %v1158 = vadd.f32 %v1126, %v1150
        %v1159 = vadd.f32 %v1127, %v1150
        %v1160 = vadd.f32 %v1128, %v1150
        %v1161 = vadd.f32 %v1129, %v1150
        %v1162 = vadd.f32 %v1130, %v1150
        %v1163 = vadd.f32 %v1131, %v1150
        %v1164 = vadd.f32 %v1132, %v1150
        %v1165 = vadd.f32 %v1133, %v1150
        %v1166 = vadd.f32 %v1134, %v1150
        %v1167 = vadd.f32 %v1135, %v1150
        %v1168 = vadd.f32 %v1136, %v1150
        %v1169 = vadd.f32 %v1137, %v1150
        %v1170 = vadd.f32 %v1138, %v1150
        %v1171 = vadd.f32 %v1139, %v1150
        %v1172 = vadd.f32 %v1140, %v1150
        %v1173 = vadd.f32 %v1141, %v1150
        %v1174 = vadd.f32 %v1142, %v1150
        %v1175 = vadd.f32 %v1143, %v1150
        %v1176 = vadd.f32 %v1144, %v1150
        %v1177 = vadd.f32 %v1152, %v1088
        %v1178 = vadd.f32 %v1153, %v1089
        %v1179 = vadd.f32 %v1154, %v1090
        %v1180 = vadd.f32 %v1155, %v1091
        %v1181 = vadd.f32 %v1156, %v1092
        %v1182 = vadd.f32 %v1157, %v1093
        %v1183 = vadd.f32 %v1158, %v1094
        %v1184 = vadd.f32 %v1159, %v1095
        %v1185 = vadd.f32 %v1160, %v1096
        %v1186 = vadd.f32 %v1161, %v1097
        %v1187 = vadd.f32 %v1162, %v1098
        %v1188 = vadd.f32 %v1163, %v1099
        %v1189 = vadd.f32 %v1164, %v1100
        %v1190 = vadd.f32 %v1165, %v1101
        %v1191 = vadd.f32 %v1166, %v1102
        %v1192 = vadd.f32 %v1167, %v1103
        %v1193 = vadd.f32 %v1168, %v1104
        %v1194 = vadd.f32 %v1169, %v1105
        %v1195 = vadd.f32 %v1170, %v1106
        %v1196 = vadd.f32 %v1171, %v1107
        %v1197 = vadd.f32 %v1172, %v1108
        %v1198 = vadd.f32 %v1173, %v1109
        %v1199 = vadd.f32 %v1174, %v1110
        %v1200 = vadd.f32 %v1175, %v1111
        %v1201 = vadd.f32 %v1176, %v1112
        %1202 = vst [vmem:[%s256] sm:$0xff] %v1177
        %1203 = vst [vmem:[%s256 + $0x8] sm:$0xff] %v1178
        %1204 = vst [vmem:[%s256 + $0x10] sm:$0xff] %v1179
        %1205 = vst [vmem:[%s256 + $0x18] sm:$0xff] %v1180
        %1206 = vst [vmem:[%s256 + $0x20] sm:$0xff] %v1181
        %1207 = vst [vmem:[%s256 + $0x28] sm:$0xff] %v1182
        %1208 = vst [vmem:[%s256 + $0x30] sm:$0xff] %v1183
        %1209 = vst [vmem:[%s256 + $0x38] sm:$0xff] %v1184
        %1210 = vst [vmem:[%s256 + $0x40] sm:$0xff] %v1185
        %1211 = vst [vmem:[%s256 + $0x48] sm:$0xff] %v1186
        %1212 = vst [vmem:[%s256 + $0x50] sm:$0xff] %v1187
        %1213 = vst [vmem:[%s256 + $0x58] sm:$0xff] %v1188
        %1214 = vst [vmem:[%s256 + $0x60] sm:$0xff] %v1189
        %1215 = vst [vmem:[%s256 + $0x68] sm:$0xff] %v1190
        %1216 = vst [vmem:[%s256 + $0x70] sm:$0xff] %v1191
        %1217 = vst [vmem:[%s256 + $0x78] sm:$0xff] %v1192
        %1218 = vst [vmem:[%s256 + $0x80] sm:$0xff] %v1193
        %1219 = vst [vmem:[%s256 + $0x88] sm:$0xff] %v1194
        %1220 = vst [vmem:[%s256 + $0x90] sm:$0xff] %v1195
        %1221 = vst [vmem:[%s256 + $0x98] sm:$0xff] %v1196
        %1222 = vst [vmem:[%s256 + $0xa0] sm:$0xff] %v1197
        %1223 = vst [vmem:[%s256 + $0xa8] sm:$0xff] %v1198
        %1224 = vst [vmem:[%s256 + $0xb0] sm:$0xff] %v1199
        %1225 = vst [vmem:[%s256 + $0xb8] sm:$0xff] %v1200
        %1226 = vst [vmem:[%s256 + $0xc0] sm:$0xff] %v1201
      $region56: #{_resblock_forward_impl.1} parent=39 // pred_fallthru
        _
      %s1227 = smul.u32 %s21, %s20
      %s1228 = smul.u32 25, %s1227
      %p1229 = scmp.lt.s32.totalorder %s1228, 24
      %s1230 = scalar_select %p1229, %s1228, 24
      %s1231 = smul.addr %s1230, 8
      %s1232 = scalar_lea.vmem %s5, %s1231
      // Predicated region
      $region57: #{_resblock_forward_impl.1} parent=39 // pred_check
        %p1233 = pneg %p162
      $region58: #{_resblock_forward_impl.1} parent=39 // pred_check_branch
        %1235 = sbr.rel (%p1233) target = $region60
      $region59: #{_resblock_forward_impl.1} parent=39 // pred_region
        %s1236 = smul.u32 %s21, %s20
        %s1237 = smul.u32 25, %s1236
      $region60: #{_resblock_forward_impl.1} parent=39 // pred_fallthru
        _
    $region40: #{_resblock_forward_impl.1} parent=5 // pred_fallthru
      _
    %p1238 = scmp.le.s32.totalorder 2, %s11
    // Predicated region
    $region61: #{_resblock_forward_impl.1} parent=5 // pred_check
      %p1239 = pneg %p1238
    $region62: #{_resblock_forward_impl.1} parent=5 // pred_check_branch
      %1241 = sbr.rel (%p1239) target = $region64
    $region63: #{_resblock_forward_impl.1} parent=5 // pred_region
      %s1242 = ssub.s32 %s11, 2
      // Predicated region
      $region65: #{_resblock_forward_impl.1} parent=63 // pred_check
        %p1243 = pneg %p168
      $region66: #{_resblock_forward_impl.1} parent=63 // pred_check_branch
        %1245 = sbr.rel (%p1243) target = $region68
      $region67: #{_resblock_forward_impl.1} parent=63 // pred_region
        %s1246 = smul.u32 %s23, %s22
        %s1247 = smul.u32 25, %s1246
        %p1248 = scmp.lt.s32.totalorder %s1247, 24
        %s1249 = scalar_select %p1248, %s1247, 24
        %s1250 = smul.addr %s1249, 8
        %s1251 = scalar_lea.vmem %s5, %s1250
      $region68: #{_resblock_forward_impl.1} parent=63 // pred_fallthru
        _
    $region64: #{_resblock_forward_impl.1} parent=5 // pred_fallthru
      _
  $region6: #{_resblock_forward_impl.1} parent=0 // loop_footer
    %s15 = sadd.s32 1, %s11
  $region7: #{_resblock_forward_impl.1} parent=0 // loop_footer_branch
    %10 = sbr.rel target = $region3
  $region8: #{_resblock_forward_impl.1} parent=0 // loop_exit
    _

// kernel: _resblock_forward_impl.1
$region0: #{_resblock_forward_impl.1}
  #allocation0 [shape = 'u32[]', space=smem, size = 0x4, offset = 0x4, fixed_abs, tag = 'smem constant byte address 0x4 - core index']
  #allocation1 [shape = 'u32[144,128]{1,0:T(1,128)}', space=vmem, size = 0x12000, scoped, tag = 'internal scratch']
  #allocation2 [shape = 'f32[1,128]{1,0:T(1,128)}', space=vmem, size = 0x200, scoped, tag = 'scratch operand']
  #allocation3 [shape = 'f32[1,128]{1,0:T(1,128)}', space=vmem, size = 0x200, scoped, tag = 'scratch operand']
  #allocation4 [shape = 'f32[200,128]{1,0:T(8,128)}', space=vmem, size = 0x19000, scoped, tag = 'scratch operand']
  #allocation5 [shape = 'f32[200,128]{1,0:T(8,128)}', space=vmem, size = 0x19000, scoped, tag = 'scratch operand']
  %s0 = inlined_call_operand.vmem [shape: f32[200,128], index: 0, kind: input, shape index: {}]
  %s1 = inlined_call_operand.vmem [shape: bf16[128,128], index: 1, kind: input, shape index: {}]
  %s2 = inlined_call_operand.vmem [shape: f32[1,128], index: 2, kind: input, shape index: {}]
  %s3 = inlined_call_operand.vmem [shape: f32[1,128], index: 3, kind: input, shape index: {}]
  %s4 = inlined_call_operand.vmem [shape: f32[1,128], index: 4, kind: input, shape index: {}]
  %s5 = inlined_call_operand.vmem [shape: f32[200,128], index: 5, kind: output, shape index: {}]
  %s6 = sld [smem:[#allocation0]]
  $region69: #{_resblock_forward_impl.1} parent=0
    _
  %s8 = ssub.s32 1, %s6
  %s9 = scalar_select 0, %s8, %s6
  loop: start=0, step=1, limit=4
  $region2: #{_resblock_forward_impl.1} parent=0 // loop_pre_header
    _
  $region3: #{_resblock_forward_impl.1} parent=0 // loop_header
    %s11 = sphi 0, %s15
    %p12 = scmp.ge.s32.totalorder %s11, 4
    %s18 = sphi 0, %s30
    %s19 = sphi 0, %s26
    %s20 = sphi 0, %s18
    %s21 = sphi 0, %s19
    %s22 = sphi 0, %s20
    %s23 = sphi 0, %s21
    %s37 = sphi 0, %s39
    %s40 = sphi 0, %s37
    %s41 = sphi 0, %s40
    %s57 = sphi 0, %s41
    %s61 = sphi 0, %s61
    %s63 = sphi 0, %s61
    %s64 = sphi 0, %s63
    %s78 = sphi 0, %s64
    %s82 = sphi 0, %s82
    %s84 = sphi 0, %s82
    %s85 = sphi 0, %s84
    %s99 = sphi 0, %s85
    %s103 = sphi 0, %s103
    %s105 = sphi 0, %s103
    %s106 = sphi 0, %s105
    %s120 = sphi 0, %s106
    %s124 = sphi 0, %s124
    %s126 = sphi 0, %s124
    %s127 = sphi 0, %s126
    %s141 = sphi 0, %s127
    %s149 = sphi 0, %s151
    %s152 = sphi 0, %s149
    %s153 = sphi 0, %s152
    %s169 = sphi 0, %s153
  $region4: #{_resblock_forward_impl.1} parent=0 // loop_header_branch
    %14 = sbr.rel (%p12) target = $region8
  $region5: #{_resblock_forward_impl.1} parent=0 // loop_body
    %s16 = ssub.s32 %s11, 1
    %s17 = ssub.s32 %s11, 2
    %s24 = sadd.s32 1, %s19
    %p25 = scmp.ge.s32.totalorder %s24, 1
    %s26 = scalar_select %p25, 0, %s24
    %s27 = sadd.s32 1, %s18
    %s28 = scalar_select %p25, %s27, %s18
    %p29 = scmp.ge.s32.totalorder %s28, 2
    %s30 = scalar_select %p29, 0, %s28
    %s31 = ssub.s32 1, %s18
    %s32 = smul.u32 %s19, %s31
    %s33 = ssub.s32 1, %s30
    %s34 = smul.u32 %s26, %s33
    %s35 = ssub.s32 %s32, %s34
    %p36 = scmp.eq.s32.totalorder %s35, 0
    %s38 = sadd.s32 %s37, 1
    %s39 = scalar_select %p36, %s37, %s38
    %p42 = pneg %p36
    %p43 = scmp.eq.s32.totalorder %s11, 1
    %p44 = por %p42, %p43
    %p45 = scmp.ne.s32.totalorder %s37, %s40
    %p46 = scmp.eq.s32.totalorder %s11, 0
    %p47 = por %p45, %p46
    %p48 = scmp.ne.s32.totalorder %s37, %s40
    %p49 = scmp.eq.s32.totalorder %s16, 1
    %p50 = por %p48, %p49
    %p51 = scmp.ne.s32.totalorder %s40, %s41
    %p52 = scmp.eq.s32.totalorder %s16, 0
    %p53 = por %p51, %p52
    %p54 = scmp.ne.s32.totalorder %s40, %s41
    %p55 = scmp.eq.s32.totalorder %s17, 1
    %p56 = por %p54, %p55
    %p58 = scmp.ne.s32.totalorder %s41, %s57
    %p59 = scmp.eq.s32.totalorder %s17, 0
    %p60 = por %p58, %p59
    %s62 = sadd.s32 %s61, 1
    %p65 = scmp.eq.s32.totalorder %s11, 1
    %p66 = scmp.ne.s32.totalorder %s61, %s63
    %p67 = scmp.eq.s32.totalorder %s11, 0
    %p68 = por %p66, %p67
    %p69 = scmp.ne.s32.totalorder %s61, %s63
    %p70 = scmp.eq.s32.totalorder %s16, 1
    %p71 = por %p69, %p70
    %p72 = scmp.ne.s32.totalorder %s63, %s64
    %p73 = scmp.eq.s32.totalorder %s16, 0
    %p74 = por %p72, %p73
    %p75 = scmp.ne.s32.totalorder %s63, %s64
    %p76 = scmp.eq.s32.totalorder %s17, 1
    %p77 = por %p75, %p76
    %p79 = scmp.ne.s32.totalorder %s64, %s78
    %p80 = scmp.eq.s32.totalorder %s17, 0
    %p81 = por %p79, %p80
    %s83 = sadd.s32 %s82, 1
    %p86 = scmp.eq.s32.totalorder %s11, 1
    %p87 = scmp.ne.s32.totalorder %s82, %s84
    %p88 = scmp.eq.s32.totalorder %s11, 0
    %p89 = por %p87, %p88
    %p90 = scmp.ne.s32.totalorder %s82, %s84
    %p91 = scmp.eq.s32.totalorder %s16, 1
    %p92 = por %p90, %p91
    %p93 = scmp.ne.s32.totalorder %s84, %s85
    %p94 = scmp.eq.s32.totalorder %s16, 0
    %p95 = por %p93, %p94
    %p96 = scmp.ne.s32.totalorder %s84, %s85
    %p97 = scmp.eq.s32.totalorder %s17, 1
    %p98 = por %p96, %p97
    %p100 = scmp.ne.s32.totalorder %s85, %s99
    %p101 = scmp.eq.s32.totalorder %s17, 0
    %p102 = por %p100, %p101
    %s104 = sadd.s32 %s103, 1
    %p107 = scmp.eq.s32.totalorder %s11, 1
    %p108 = scmp.ne.s32.totalorder %s103, %s105
    %p109 = scmp.eq.s32.totalorder %s11, 0
    %p110 = por %p108, %p109
    %p111 = scmp.ne.s32.totalorder %s103, %s105
    %p112 = scmp.eq.s32.totalorder %s16, 1
    %p113 = por %p111, %p112
    %p114 = scmp.ne.s32.totalorder %s105, %s106
    %p115 = scmp.eq.s32.totalorder %s16, 0
    %p116 = por %p114, %p115
    %p117 = scmp.ne.s32.totalorder %s105, %s106
    %p118 = scmp.eq.s32.totalorder %s17, 1
    %p119 = por %p117, %p118
    %p121 = scmp.ne.s32.totalorder %s106, %s120
    %p122 = scmp.eq.s32.totalorder %s17, 0
    %p123 = por %p121, %p122
    %s125 = sadd.s32 %s124, 1
    %p128 = scmp.eq.s32.totalorder %s11, 1
    %p129 = scmp.ne.s32.totalorder %s124, %s126
    %p130 = scmp.eq.s32.totalorder %s11, 0
    %p131 = por %p129, %p130
    %p132 = scmp.ne.s32.totalorder %s124, %s126
    %p133 = scmp.eq.s32.totalorder %s16, 1
    %p134 = por %p132, %p133
    %p135 = scmp.ne.s32.totalorder %s126, %s127
    %p136 = scmp.eq.s32.totalorder %s16, 0
    %p137 = por %p135, %p136
    %p138 = scmp.ne.s32.totalorder %s126, %s127
    %p139 = scmp.eq.s32.totalorder %s17, 1
    %p140 = por %p138, %p139
    %p142 = scmp.ne.s32.totalorder %s127, %s141
    %p143 = scmp.eq.s32.totalorder %s17, 0
    %p144 = por %p142, %p143
    %s145 = smul.u32 %s19, %s18
    %s146 = smul.u32 %s26, %s30
    %s147 = ssub.s32 %s145, %s146
    %p148 = scmp.eq.s32.totalorder %s147, 0
    %s150 = sadd.s32 %s149, 1
    %s151 = scalar_select %p148, %s149, %s150
    %p154 = pneg %p148
    %p155 = scmp.eq.s32.totalorder %s11, 1
    %p156 = por %p154, %p155
    %p157 = scmp.ne.s32.totalorder %s149, %s152
    %p158 = scmp.eq.s32.totalorder %s11, 0
    %p159 = por %p157, %p158
    %p160 = scmp.ne.s32.totalorder %s149, %s152
    %p161 = scmp.eq.s32.totalorder %s16, 1
    %p162 = por %p160, %p161
    %p163 = scmp.ne.s32.totalorder %s152, %s153
    %p164 = scmp.eq.s32.totalorder %s16, 0
    %p165 = por %p163, %p164
    %p166 = scmp.ne.s32.totalorder %s152, %s153
    %p167 = scmp.eq.s32.totalorder %s17, 1
    %p168 = por %p166, %p167
    %p170 = scmp.ne.s32.totalorder %s153, %s169
    %p171 = scmp.eq.s32.totalorder %s17, 0
    %p172 = por %p170, %p171
    %p173 = scmp.le.s32.totalorder 1, %s11
    %p174 = scmp.lt.s32.totalorder %s11, 3
    %p175 = pnand %p173, %p174
    %p176 = pneg %p175
    // Predicated region
    $region9: #{_resblock_forward_impl.1} parent=5 // pred_check
      _
    $region10: #{_resblock_forward_impl.1} parent=5 // pred_check_branch
      %178 = sbr.rel (%p175) target = $region12
    $region11: #{_resblock_forward_impl.1} parent=5 // pred_region
      %s179 = ssub.s32 %s11, 1
      // Predicated region
      $region13: #{_resblock_forward_impl.1} parent=11 // pred_check
        %p180 = pneg %p74
      $region14: #{_resblock_forward_impl.1} parent=11 // pred_check_branch
        %182 = sbr.rel (%p180) target = $region16
      $region15: #{_resblock_forward_impl.1} parent=11 // pred_region
        _
      $region16: #{_resblock_forward_impl.1} parent=11 // pred_fallthru
        _
      // Predicated region
      $region17: #{_resblock_forward_impl.1} parent=11 // pred_check
        %p183 = pneg %p95
      $region18: #{_resblock_forward_impl.1} parent=11 // pred_check_branch
        %185 = sbr.rel (%p183) target = $region20
      $region19: #{_resblock_forward_impl.1} parent=11 // pred_region
        _
      $region20: #{_resblock_forward_impl.1} parent=11 // pred_fallthru
        _
      // Predicated region
      $region21: #{_resblock_forward_impl.1} parent=11 // pred_check
        %p186 = pneg %p116
      $region22: #{_resblock_forward_impl.1} parent=11 // pred_check_branch
        %188 = sbr.rel (%p186) target = $region24
      $region23: #{_resblock_forward_impl.1} parent=11 // pred_region
        _
      $region24: #{_resblock_forward_impl.1} parent=11 // pred_fallthru
        _
      // Predicated region
      $region25: #{_resblock_forward_impl.1} parent=11 // pred_check
        %p189 = pneg %p137
      $region26: #{_resblock_forward_impl.1} parent=11 // pred_check_branch
        %191 = sbr.rel (%p189) target = $region28
      $region27: #{_resblock_forward_impl.1} parent=11 // pred_region
        _
      $region28: #{_resblock_forward_impl.1} parent=11 // pred_fallthru
        _
    $region12: #{_resblock_forward_impl.1} parent=5 // pred_fallthru
      _
    %p192 = scmp.lt.s32.totalorder %s11, 2
    // Predicated region
    $region29: #{_resblock_forward_impl.1} parent=5 // pred_check
      %p193 = pneg %p192
    $region30: #{_resblock_forward_impl.1} parent=5 // pred_check_branch
      %195 = sbr.rel (%p193) target = $region32
    $region31: #{_resblock_forward_impl.1} parent=5 // pred_region
      // Predicated region
      $region33: #{_resblock_forward_impl.1} parent=31 // pred_check
        %p196 = pneg %p47
      $region34: #{_resblock_forward_impl.1} parent=31 // pred_check_branch
        %198 = sbr.rel (%p196) target = $region36
      $region35: #{_resblock_forward_impl.1} parent=31 // pred_region
        %s199 = ssub.s32 1, %s18
        %s200 = smul.u32 %s19, %s199
        %s201 = smul.u32 25, %s200
        %p202 = scmp.lt.s32.totalorder %s201, 24
        %s203 = scalar_select %p202, %s201, 24
        %s204 = smul.addr %s203, 8
        %s205 = scalar_lea.vmem %s0, %s204
        %s206 = ssub.s32 1, %s18
        %s207 = smul.u32 %s19, %s206
        %s208 = smul.u32 25, %s207
      $region36: #{_resblock_forward_impl.1} parent=31 // pred_fallthru
        _
    $region32: #{_resblock_forward_impl.1} parent=5 // pred_fallthru
      _
    %p209 = scmp.le.s32.totalorder 1, %s11
    %p210 = scmp.lt.s32.totalorder %s11, 3
    %p211 = pnand %p209, %p210
    %p212 = pneg %p211
    // Predicated region
    $region37: #{_resblock_forward_impl.1} parent=5 // pred_check
      _
    $region38: #{_resblock_forward_impl.1} parent=5 // pred_check_branch
      %214 = sbr.rel (%p211) target = $region40
    $region39: #{_resblock_forward_impl.1} parent=5 // pred_region
      %s215 = ssub.s32 %s11, 1
      %s216 = ssub.s32 1, %s20
      %s217 = smul.u32 %s21, %s216
      %s218 = smul.u32 25, %s217
      %p219 = scmp.lt.s32.totalorder %s218, 24
      %s220 = scalar_select %p219, %s218, 24
      %s221 = smul.addr %s220, 8
      %s222 = scalar_lea.vmem %s0, %s221
      %p223 = pneg %p53
      %p224 = pneg %p50
      %p225 = pneg %p74
      %p226 = pneg %p71
      %p227 = pneg %p95
      %p228 = pneg %p92
      %p229 = pneg %p116
      %p230 = pneg %p113
      %p231 = pneg %p137
      %p232 = pneg %p134
      %p233 = pneg %p165
      %p234 = pneg %p162
      %s235 = smul.u32 %s21, %s20
      %s236 = smul.u32 25, %s235
      %p237 = scmp.lt.s32.totalorder %s236, 24
      %s238 = scalar_select %p237, %s236, 24
      %s239 = smul.addr %s238, 8
      %s240 = scalar_lea.vmem %s5, %s239
      %s241 = ssub.s32 1, %s20
      %s242 = smul.u32 %s21, %s241
      %s243 = smul.u32 25, %s242
      %p244 = scmp.lt.s32.totalorder %s243, 24
      %s245 = scalar_select %p244, %s243, 24
      %s246 = smul.addr %s245, 8
      %s247 = scalar_lea.vmem %s0, %s246
      %s248 = ssub.s32 1, %s20
      %s249 = smul.u32 %s21, %s248
      %s250 = smul.u32 25, %s249
      %s251 = smul.u32 %s21, %s20
      %s252 = smul.u32 25, %s251
      %p253 = scmp.lt.s32.totalorder %s252, 24
      %s254 = scalar_select %p253, %s252, 24
      %s255 = smul.addr %s254, 8
      %s256 = scalar_lea.vmem %s5, %s255
      %s257 = smul.u32 %s21, %s20
      %s258 = smul.u32 25, %s257
      %p260 = scmp.eq.s32.totalorder %s20, 0
      %p261 = scmp.eq.s32.totalorder %s21, 0
      %p262 = pnand %p260, %p261
      %p263 = pneg %p262
      // Predicated region
      $region41: #{_resblock_forward_impl.1} parent=39 // pred_check
        _
      $region42: #{_resblock_forward_impl.1} parent=39 // pred_check_branch
        %265 = sbr.rel (%p262) target = $region44
      $region43: #{_resblock_forward_impl.1} parent=39 // pred_region
        %266 = vst [vmem:[#allocation2] sm:$0x1] 0.0
        %267 = vst [vmem:[#allocation3] sm:$0x1] 0.0
      $region44: #{_resblock_forward_impl.1} parent=39 // pred_fallthru
        _
      // Predicated region
      $region45: #{_resblock_forward_impl.1} parent=39 // pred_check
        %p268 = pneg %p260
      $region46: #{_resblock_forward_impl.1} parent=39 // pred_check_branch
        %270 = sbr.rel (%p268) target = $region48
      $region47: #{_resblock_forward_impl.1} parent=39 // pred_region
        %v271 = vld [vmem:[%s247] sm:$0xff]
        %v272 = vld [vmem:[%s247 + $0x8] sm:$0xff]
        %v273 = vld [vmem:[%s247 + $0x10] sm:$0xff]
        %v274 = vld [vmem:[%s247 + $0x18] sm:$0xff]
        %v275 = vld [vmem:[%s247 + $0x20] sm:$0xff]
        %v276 = vld [vmem:[%s247 + $0x28] sm:$0xff]
        %v277 = vld [vmem:[%s247 + $0x30] sm:$0xff]
        %v278 = vld [vmem:[%s247 + $0x38] sm:$0xff]
        %v279 = vld [vmem:[%s247 + $0x40] sm:$0xff]
        %v280 = vld [vmem:[%s247 + $0x48] sm:$0xff]
        %v281 = vld [vmem:[%s247 + $0x50] sm:$0xff]
        %v282 = vld [vmem:[%s247 + $0x58] sm:$0xff]
        %v283 = vld [vmem:[%s247 + $0x60] sm:$0xff]
        %v284 = vld [vmem:[%s247 + $0x68] sm:$0xff]
        %v285 = vld [vmem:[%s247 + $0x70] sm:$0xff]
        %v286 = vld [vmem:[%s247 + $0x78] sm:$0xff]
        %v287 = vld [vmem:[%s247 + $0x80] sm:$0xff]
        %v288 = vld [vmem:[%s247 + $0x88] sm:$0xff]
        %v289 = vld [vmem:[%s247 + $0x90] sm:$0xff]
        %v290 = vld [vmem:[%s247 + $0x98] sm:$0xff]
        %v291 = vld [vmem:[%s247 + $0xa0] sm:$0xff]
        %v292 = vld [vmem:[%s247 + $0xa8] sm:$0xff]
        %v293 = vld [vmem:[%s247 + $0xb0] sm:$0xff]
        %v294 = vld [vmem:[%s247 + $0xb8] sm:$0xff]
        %v295 = vld [vmem:[%s247 + $0xc0] sm:$0xff]
        %v296 = vpack.c.bf16 %v272, %v271
        %v297 = vpack.c.bf16 %v274, %v273
        %v298 = vpack.c.bf16 %v276, %v275
        %v299 = vpack.c.bf16 %v278, %v277
        %v300 = vpack.c.bf16 %v280, %v279
        %v301 = vpack.c.bf16 %v282, %v281
        %v302 = vpack.c.bf16 %v284, %v283
        %v303 = vpack.c.bf16 %v286, %v285
        %v304 = vpack.c.bf16 %v288, %v287
        %v305 = vpack.c.bf16 %v290, %v289
        %v306 = vpack.c.bf16 %v292, %v291
        %v307 = vpack.c.bf16 %v294, %v293
        %v308 = vpack.c.bf16 %v295, %v295
        %v309 = vld [vmem:[%s1] sm:$0xf]
        %v310 = vld [vmem:[%s1 + $0x4] sm:$0xf]
        %v311 = vld [vmem:[%s1 + $0x8] sm:$0xf]
        %v312 = vld [vmem:[%s1 + $0xc] sm:$0xf]
        %v313 = vld [vmem:[%s1 + $0x10] sm:$0xf]
        %v314 = vld [vmem:[%s1 + $0x14] sm:$0xf]
        %v315 = vld [vmem:[%s1 + $0x18] sm:$0xf]
        %v316 = vld [vmem:[%s1 + $0x1c] sm:$0xf]
        %v317 = vld [vmem:[%s1 + $0x20] sm:$0xf]
        %v318 = vld [vmem:[%s1 + $0x24] sm:$0xf]
        %v319 = vld [vmem:[%s1 + $0x28] sm:$0xf]
        %v320 = vld [vmem:[%s1 + $0x2c] sm:$0xf]
        %v321 = vld [vmem:[%s1 + $0x30] sm:$0xf]
        %v322 = vld [vmem:[%s1 + $0x34] sm:$0xf]
        %v323 = vld [vmem:[%s1 + $0x38] sm:$0xf]
        %v324 = vld [vmem:[%s1 + $0x3c] sm:$0xf]
        %v325 = vld [vmem:[%s2] sm:$0x1]
        %v327 = vlaneseq
        %v328 = vshrl.u32 %v327, 7
        %v329 = vsub.s32 0, %v328
        %v330 = vrot.slane %v325, %v329
        %v348 = vunpack.c.l.b16 %v309
        %v349 = vunpack.c.l.b16 %v310
        %v350 = vunpack.c.l.b16 %v311
        %v351 = vunpack.c.l.b16 %v312
        %v352 = vunpack.c.l.b16 %v313
        %v353 = vunpack.c.l.b16 %v314
        %v354 = vunpack.c.l.b16 %v315
        %v355 = vunpack.c.l.b16 %v316
        %v356 = vunpack.c.l.b16 %v317
        %v357 = vunpack.c.l.b16 %v318
        %v358 = vunpack.c.l.b16 %v319
        %v359 = vunpack.c.l.b16 %v320
        %v360 = vunpack.c.l.b16 %v321
        %v361 = vunpack.c.l.b16 %v322
        %v362 = vunpack.c.l.b16 %v323
        %v363 = vunpack.c.l.b16 %v324
        %v364 = vpack.c.b16 %v349, %v348
        %v365 = vpack.c.b16 %v351, %v350
        %v366 = vpack.c.b16 %v353, %v352
        %v367 = vpack.c.b16 %v355, %v354
        %v368 = vpack.c.b16 %v357, %v356
        %v369 = vpack.c.b16 %v359, %v358
        %v370 = vpack.c.b16 %v361, %v360
        %v371 = vpack.c.b16 %v363, %v362
        %380 = vmatprep.subr.bf16.mxu0 0
        %381 = vmatpush1.bf16.msra.mxu0 %v371
        %382 = vmatprep.subr.bf16.mxu0 0
        %383 = vmatpush1.bf16.msra.mxu0 %v370
        %384 = vmatprep.subr.bf16.mxu0 0
        %385 = vmatpush1.bf16.msra.mxu0 %v369
        %386 = vmatprep.subr.bf16.mxu0 0
        %387 = vmatpush1.bf16.msra.mxu0 %v368
        %388 = vmatprep.subr.bf16.mxu0 0
        %389 = vmatpush1.bf16.msra.mxu0 %v367
        %390 = vmatprep.subr.bf16.mxu0 0
        %391 = vmatpush1.bf16.msra.mxu0 %v366
        %392 = vmatprep.subr.bf16.mxu0 0
        %393 = vmatpush1.bf16.msra.mxu0 %v365
        %394 = vmatprep.subr.bf16.mxu0 0
        %395 = vmatpush1.bf16.msra.mxu0 %v364
        %396 = vmatprep.subr.bf16.mxu0 0
        %397 = vmatpush2.bf16.msra.mxu0 0
        %398 = vmatprep.subr.bf16.mxu0 0
        %399 = vmatpush2.bf16.msra.mxu0 0
        %400 = vmatprep.subr.bf16.mxu0 0
        %401 = vmatpush2.bf16.msra.mxu0 0
        %402 = vmatprep.subr.bf16.mxu0 0
        %403 = vmatpush2.bf16.msra.mxu0 0
        %404 = vmatprep.subr.bf16.mxu0 0
        %405 = vmatpush2.bf16.msra.mxu0 0
        %406 = vmatprep.subr.bf16.mxu0 0
        %407 = vmatpush2.bf16.msra.mxu0 0
        %408 = vmatprep.subr.bf16.mxu0 0
        %409 = vmatpush2.bf16.msra.mxu0 0
        %410 = vmatprep.subr.bf16.mxu0 0
        %411 = vmatpush2.bf16.msra.mxu0 0
        %412 = vmatprep.mubr.bf16.mxu0 0
        %413 = vmatmul.mubr.bf16.gmra.mxu0 %v296
        %v414 = vpop.f32.mrf.mxu0
        %v415 = vadd.f32 %v330, %v414
        %v416 = vpop.f32.mrf.mxu0
        %v417 = vpop.f32.mrf.mxu0
        %v418 = vadd.f32 %v330, %v417
        %v419 = vpop.f32.mrf.mxu0
        %420 = vmatprep.mubr.bf16.mxu0 0
        %421 = vmatmul.mubr.bf16.gmra.mxu0 %v297
        %v422 = vpop.f32.mrf.mxu0
        %v423 = vadd.f32 %v330, %v422
        %v424 = vpop.f32.mrf.mxu0
        %v425 = vpop.f32.mrf.mxu0
        %v426 = vadd.f32 %v330, %v425
        %v427 = vpop.f32.mrf.mxu0
        %428 = vmatprep.mubr.bf16.mxu0 0
        %429 = vmatmul.mubr.bf16.gmra.mxu0 %v298
        %v430 = vpop.f32.mrf.mxu0
        %v431 = vadd.f32 %v330, %v430
        %v432 = vpop.f32.mrf.mxu0
        %v433 = vpop.f32.mrf.mxu0
        %v434 = vadd.f32 %v330, %v433
        %v435 = vpop.f32.mrf.mxu0
        %436 = vmatprep.mubr.bf16.mxu0 0
        %437 = vmatmul.mubr.bf16.gmra.mxu0 %v299
        %v438 = vpop.f32.mrf.mxu0
        %v439 = vadd.f32 %v330, %v438
        %v440 = vpop.f32.mrf.mxu0
        %v441 = vpop.f32.mrf.mxu0
        %v442 = vadd.f32 %v330, %v441
        %v443 = vpop.f32.mrf.mxu0
        %444 = vmatprep.mubr.bf16.mxu0 0
        %445 = vmatmul.mubr.bf16.gmra.mxu0 %v300
        %v446 = vpop.f32.mrf.mxu0
        %v447 = vadd.f32 %v330, %v446
        %v448 = vpop.f32.mrf.mxu0
        %v449 = vpop.f32.mrf.mxu0
        %v450 = vadd.f32 %v330, %v449
        %v451 = vpop.f32.mrf.mxu0
        %452 = vmatprep.mubr.bf16.mxu0 0
        %453 = vmatmul.mubr.bf16.gmra.mxu0 %v301
        %v454 = vpop.f32.mrf.mxu0
        %v455 = vadd.f32 %v330, %v454
        %v456 = vpop.f32.mrf.mxu0
        %v457 = vpop.f32.mrf.mxu0
        %v458 = vadd.f32 %v330, %v457
        %v459 = vpop.f32.mrf.mxu0
        %460 = vmatprep.mubr.bf16.mxu0 0
        %461 = vmatmul.mubr.bf16.gmra.mxu0 %v302
        %v462 = vpop.f32.mrf.mxu0
        %v463 = vadd.f32 %v330, %v462
        %v464 = vpop.f32.mrf.mxu0
        %v465 = vpop.f32.mrf.mxu0
        %v466 = vadd.f32 %v330, %v465
        %v467 = vpop.f32.mrf.mxu0
        %468 = vmatprep.mubr.bf16.mxu0 0
        %469 = vmatmul.mubr.bf16.gmra.mxu0 %v303
        %v470 = vpop.f32.mrf.mxu0
        %v471 = vadd.f32 %v330, %v470
        %v472 = vpop.f32.mrf.mxu0
        %v473 = vpop.f32.mrf.mxu0
        %v474 = vadd.f32 %v330, %v473
        %v475 = vpop.f32.mrf.mxu0
        %476 = vmatprep.mubr.bf16.mxu0 0
        %477 = vmatmul.mubr.bf16.gmra.mxu0 %v304
        %v478 = vpop.f32.mrf.mxu0
        %v479 = vadd.f32 %v330, %v478
        %v480 = vpop.f32.mrf.mxu0
        %v481 = vpop.f32.mrf.mxu0
        %v482 = vadd.f32 %v330, %v481
        %v483 = vpop.f32.mrf.mxu0
        %484 = vmatprep.mubr.bf16.mxu0 0
        %485 = vmatmul.mubr.bf16.gmra.mxu0 %v305
        %v486 = vpop.f32.mrf.mxu0
        %v487 = vadd.f32 %v330, %v486
        %v488 = vpop.f32.mrf.mxu0
        %v489 = vpop.f32.mrf.mxu0
        %v490 = vadd.f32 %v330, %v489
        %v491 = vpop.f32.mrf.mxu0
        %492 = vmatprep.mubr.bf16.mxu0 0
        %493 = vmatmul.mubr.bf16.gmra.mxu0 %v306
        %v494 = vpop.f32.mrf.mxu0
        %v495 = vadd.f32 %v330, %v494
        %v496 = vpop.f32.mrf.mxu0
        %v497 = vpop.f32.mrf.mxu0
        %v498 = vadd.f32 %v330, %v497
        %v499 = vpop.f32.mrf.mxu0
        %500 = vmatprep.mubr.bf16.mxu0 0
        %501 = vmatmul.mubr.bf16.gmra.mxu0 %v307
        %v502 = vpop.f32.mrf.mxu0
        %v503 = vadd.f32 %v330, %v502
        %v504 = vpop.f32.mrf.mxu0
        %v505 = vpop.f32.mrf.mxu0
        %v506 = vadd.f32 %v330, %v505
        %v507 = vpop.f32.mrf.mxu0
        %508 = vmatprep.mubr.bf16.mxu0 0
        %509 = vmatmul.mubr.bf16.gmra.mxu0 %v308
        %v510 = vpop.f32.mrf.mxu0
        %v511 = vadd.f32 %v330, %v510
        %v512 = vpop.f32.mrf.mxu0
        %v513 = vpop.f32.mrf.mxu0
        %v514 = vpop.f32.mrf.mxu0
        %515 = vdwg.mxu0
        %v516 = vmul.f32 %v415, 0.5
        %v517 = vmul.f32 %v418, 0.5
        %v518 = vmul.f32 %v423, 0.5
        %v519 = vmul.f32 %v426, 0.5
        %v520 = vmul.f32 %v431, 0.5
        %v521 = vmul.f32 %v434, 0.5
        %v522 = vmul.f32 %v439, 0.5
        %v523 = vmul.f32 %v442, 0.5
        %v524 = vmul.f32 %v447, 0.5
        %v525 = vmul.f32 %v450, 0.5
        %v526 = vmul.f32 %v455, 0.5
        %v527 = vmul.f32 %v458, 0.5
        %v528 = vmul.f32 %v463, 0.5
        %v529 = vmul.f32 %v466, 0.5
        %v530 = vmul.f32 %v471, 0.5
        %v531 = vmul.f32 %v474, 0.5
        %v532 = vmul.f32 %v479, 0.5
        %v533 = vmul.f32 %v482, 0.5
        %v534 = vmul.f32 %v487, 0.5
        %v535 = vmul.f32 %v490, 0.5
        %v536 = vmul.f32 %v495, 0.5
        %v537 = vmul.f32 %v498, 0.5
        %v538 = vmul.f32 %v503, 0.5
        %v539 = vmul.f32 %v506, 0.5
        %v540 = vmul.f32 %v511, 0.5
        %v541 = vmul.f32 %v415, %v415
        %v542 = vmul.f32 %v418, %v418
        %v543 = vmul.f32 %v423, %v423
        %v544 = vmul.f32 %v426, %v426
        %v545 = vmul.f32 %v431, %v431
        %v546 = vmul.f32 %v434, %v434
        %v547 = vmul.f32 %v439, %v439
        %v548 = vmul.f32 %v442, %v442
        %v549 = vmul.f32 %v447, %v447
        %v550 = vmul.f32 %v450, %v450
        %v551 = vmul.f32 %v455, %v455
        %v552 = vmul.f32 %v458, %v458
        %v553 = vmul.f32 %v463, %v463
        %v554 = vmul.f32 %v466, %v466
        %v555 = vmul.f32 %v471, %v471
        %v556 = vmul.f32 %v474, %v474
        %v557 = vmul.f32 %v479, %v479
        %v558 = vmul.f32 %v482, %v482
        %v559 = vmul.f32 %v487, %v487
        %v560 = vmul.f32 %v490, %v490
        %v561 = vmul.f32 %v495, %v495
        %v562 = vmul.f32 %v498, %v498
        %v563 = vmul.f32 %v503, %v503
        %v564 = vmul.f32 %v506, %v506
        %v565 = vmul.f32 %v511, %v511
        %v566 = vmul.f32 %v541, %v415
        %v567 = vmul.f32 %v542, %v418
        %v568 = vmul.f32 %v543, %v423
        %v569 = vmul.f32 %v544, %v426
        %v570 = vmul.f32 %v545, %v431
        %v571 = vmul.f32 %v546, %v434
        %v572 = vmul.f32 %v547, %v439
        %v573 = vmul.f32 %v548, %v442
        %v574 = vmul.f32 %v549, %v447
        %v575 = vmul.f32 %v550, %v450
        %v576 = vmul.f32 %v551, %v455
        %v577 = vmul.f32 %v552, %v458
        %v578 = vmul.f32 %v553, %v463
        %v579 = vmul.f32 %v554, %v466
        %v580 = vmul.f32 %v555, %v471
        %v581 = vmul.f32 %v556, %v474
        %v582 = vmul.f32 %v557, %v479
        %v583 = vmul.f32 %v558, %v482
        %v584 = vmul.f32 %v559, %v487
        %v585 = vmul.f32 %v560, %v490
        %v586 = vmul.f32 %v561, %v495
        %v587 = vmul.f32 %v562, %v498
        %v588 = vmul.f32 %v563, %v503
        %v589 = vmul.f32 %v564, %v506
        %v590 = vmul.f32 %v565, %v511
        %v591 = vmul.f32 %v566, 0.044715
        %v592 = vmul.f32 %v567, 0.044715
        %v593 = vmul.f32 %v568, 0.044715
        %v594 = vmul.f32 %v569, 0.044715
        %v595 = vmul.f32 %v570, 0.044715
        %v596 = vmul.f32 %v571, 0.044715
        %v597 = vmul.f32 %v572, 0.044715
        %v598 = vmul.f32 %v573, 0.044715
        %v599 = vmul.f32 %v574, 0.044715
        %v600 = vmul.f32 %v575, 0.044715
        %v601 = vmul.f32 %v576, 0.044715
        %v602 = vmul.f32 %v577, 0.044715
        %v603 = vmul.f32 %v578, 0.044715
        %v604 = vmul.f32 %v579, 0.044715
        %v605 = vmul.f32 %v580, 0.044715
        %v606 = vmul.f32 %v581, 0.044715
        %v607 = vmul.f32 %v582, 0.044715
        %v608 = vmul.f32 %v583, 0.044715
        %v609 = vmul.f32 %v584, 0.044715
        %v610 = vmul.f32 %v585, 0.044715
        %v611 = vmul.f32 %v586, 0.044715
        %v612 = vmul.f32 %v587, 0.044715
        %v613 = vmul.f32 %v588, 0.044715
        %v614 = vmul.f32 %v589, 0.044715
        %v615 = vmul.f32 %v590, 0.044715
        %v616 = vadd.f32 %v415, %v591
        %v617 = vadd.f32 %v418, %v592
        %v618 = vadd.f32 %v423, %v593
        %v619 = vadd.f32 %v426, %v594
        %v620 = vadd.f32 %v431, %v595
        %v621 = vadd.f32 %v434, %v596
        %v622 = vadd.f32 %v439, %v597
        %v623 = vadd.f32 %v442, %v598
        %v624 = vadd.f32 %v447, %v599
        %v625 = vadd.f32 %v450, %v600
        %v626 = vadd.f32 %v455, %v601
        %v627 = vadd.f32 %v458, %v602
        %v628 = vadd.f32 %v463, %v603
        %v629 = vadd.f32 %v466, %v604
        %v630 = vadd.f32 %v471, %v605
        %v631 = vadd.f32 %v474, %v606
        %v632 = vadd.f32 %v479, %v607
        %v633 = vadd.f32 %v482, %v608
        %v634 = vadd.f32 %v487, %v609
        %v635 = vadd.f32 %v490, %v610
        %v636 = vadd.f32 %v495, %v611
        %v637 = vadd.f32 %v498, %v612
        %v638 = vadd.f32 %v503, %v613
        %v639 = vadd.f32 %v506, %v614
        %v640 = vadd.f32 %v511, %v615
        %v641 = vmul.f32 %v616, 0.7978846
        %v642 = vmul.f32 %v617, 0.7978846
        %v643 = vmul.f32 %v618, 0.7978846
        %v644 = vmul.f32 %v619, 0.7978846
        %v645 = vmul.f32 %v620, 0.7978846
        %v646 = vmul.f32 %v621, 0.7978846
        %v647 = vmul.f32 %v622, 0.7978846
        %v648 = vmul.f32 %v623, 0.7978846
        %v649 = vmul.f32 %v624, 0.7978846
        %v650 = vmul.f32 %v625, 0.7978846
        %v651 = vmul.f32 %v626, 0.7978846
        %v652 = vmul.f32 %v627, 0.7978846
        %v653 = vmul.f32 %v628, 0.7978846
        %v654 = vmul.f32 %v629, 0.7978846
        %v655 = vmul.f32 %v630, 0.7978846
        %v656 = vmul.f32 %v631, 0.7978846
        %v657 = vmul.f32 %v632, 0.7978846
        %v658 = vmul.f32 %v633, 0.7978846
        %v659 = vmul.f32 %v634, 0.7978846
        %v660 = vmul.f32 %v635, 0.7978846
        %v661 = vmul.f32 %v636, 0.7978846
        %v662 = vmul.f32 %v637, 0.7978846
        %v663 = vmul.f32 %v638, 0.7978846
        %v664 = vmul.f32 %v639, 0.7978846
        %v665 = vmul.f32 %v640, 0.7978846
        %v666 = vtanh.pop %v641
        %v667 = vtanh.pop %v642
        %v668 = vtanh.pop %v643
        %v669 = vtanh.pop %v644
        %v670 = vtanh.pop %v645
        %v671 = vtanh.pop %v646
        %v672 = vtanh.pop %v647
        %v673 = vtanh.pop %v648
        %v674 = vtanh.pop %v649
        %v675 = vtanh.pop %v650
        %v676 = vtanh.pop %v651
        %v677 = vtanh.pop %v652
        %v678 = vtanh.pop %v653
        %v679 = vtanh.pop %v654
        %v680 = vtanh.pop %v655
        %v681 = vtanh.pop %v656
        %v682 = vtanh.pop %v657
        %v683 = vtanh.pop %v658
        %v684 = vtanh.pop %v659
        %v685 = vtanh.pop %v660
        %v686 = vtanh.pop %v661
        %v687 = vtanh.pop %v662
        %v688 = vtanh.pop %v663
        %v689 = vtanh.pop %v664
        %v690 = vtanh.pop %v665
        %v691 = vadd.f32 %v666, 1.0
        %v692 = vadd.f32 %v667, 1.0
        %v693 = vadd.f32 %v668, 1.0
        %v694 = vadd.f32 %v669, 1.0
        %v695 = vadd.f32 %v670, 1.0
        %v696 = vadd.f32 %v671, 1.0
        %v697 = vadd.f32 %v672, 1.0
        %v698 = vadd.f32 %v673, 1.0
        %v699 = vadd.f32 %v674, 1.0
        %v700 = vadd.f32 %v675, 1.0
        %v701 = vadd.f32 %v676, 1.0
        %v702 = vadd.f32 %v677, 1.0
        %v703 = vadd.f32 %v678, 1.0
        %v704 = vadd.f32 %v679, 1.0
        %v705 = vadd.f32 %v680, 1.0
        %v706 = vadd.f32 %v681, 1.0
        %v707 = vadd.f32 %v682, 1.0
        %v708 = vadd.f32 %v683, 1.0
        %v709 = vadd.f32 %v684, 1.0
        %v710 = vadd.f32 %v685, 1.0
        %v711 = vadd.f32 %v686, 1.0
        %v712 = vadd.f32 %v687, 1.0
        %v713 = vadd.f32 %v688, 1.0
        %v714 = vadd.f32 %v689, 1.0
        %v715 = vadd.f32 %v690, 1.0
        %v716 = vmul.f32 %v516, %v691
        %v717 = vmul.f32 %v517, %v692
        %v718 = vmul.f32 %v518, %v693
        %v719 = vmul.f32 %v519, %v694
        %v720 = vmul.f32 %v520, %v695
        %v721 = vmul.f32 %v521, %v696
        %v722 = vmul.f32 %v522, %v697
        %v723 = vmul.f32 %v523, %v698
        %v724 = vmul.f32 %v524, %v699
        %v725 = vmul.f32 %v525, %v700
        %v726 = vmul.f32 %v526, %v701
        %v727 = vmul.f32 %v527, %v702
        %v728 = vmul.f32 %v528, %v703
        %v729 = vmul.f32 %v529, %v704
        %v730 = vmul.f32 %v530, %v705
        %v731 = vmul.f32 %v531, %v706
        %v732 = vmul.f32 %v532, %v707
        %v733 = vmul.f32 %v533, %v708
        %v734 = vmul.f32 %v534, %v709
        %v735 = vmul.f32 %v535, %v710
        %v736 = vmul.f32 %v536, %v711
        %v737 = vmul.f32 %v537, %v712
        %v738 = vmul.f32 %v538, %v713
        %v739 = vmul.f32 %v539, %v714
        %v740 = vmul.f32 %v540, %v715
        %s741 = smul.u32 %s21, 200
        %s742 = scalar_lea.vmem [#allocation4], %s741
        %743 = vst [vmem:[%s742] sm:$0xff] %v716
        %744 = vst [vmem:[%s742 + $0x8] sm:$0xff] %v717
        %745 = vst [vmem:[%s742 + $0x10] sm:$0xff] %v718
        %746 = vst [vmem:[%s742 + $0x18] sm:$0xff] %v719
        %747 = vst [vmem:[%s742 + $0x20] sm:$0xff] %v720
        %748 = vst [vmem:[%s742 + $0x28] sm:$0xff] %v721
        %749 = vst [vmem:[%s742 + $0x30] sm:$0xff] %v722
        %750 = vst [vmem:[%s742 + $0x38] sm:$0xff] %v723
        %751 = vst [vmem:[%s742 + $0x40] sm:$0xff] %v724
        %752 = vst [vmem:[%s742 + $0x48] sm:$0xff] %v725
        %753 = vst [vmem:[%s742 + $0x50] sm:$0xff] %v726
        %754 = vst [vmem:[%s742 + $0x58] sm:$0xff] %v727
        %755 = vst [vmem:[%s742 + $0x60] sm:$0xff] %v728
        %756 = vst [vmem:[%s742 + $0x68] sm:$0xff] %v729
        %757 = vst [vmem:[%s742 + $0x70] sm:$0xff] %v730
        %758 = vst [vmem:[%s742 + $0x78] sm:$0xff] %v731
        %759 = vst [vmem:[%s742 + $0x80] sm:$0xff] %v732
        %760 = vst [vmem:[%s742 + $0x88] sm:$0xff] %v733
        %761 = vst [vmem:[%s742 + $0x90] sm:$0xff] %v734
        %762 = vst [vmem:[%s742 + $0x98] sm:$0xff] %v735
        %763 = vst [vmem:[%s742 + $0xa0] sm:$0xff] %v736
        %764 = vst [vmem:[%s742 + $0xa8] sm:$0xff] %v737
        %765 = vst [vmem:[%s742 + $0xb0] sm:$0xff] %v738
        %766 = vst [vmem:[%s742 + $0xb8] sm:$0xff] %v739
        %767 = vst [vmem:[%s742 + $0xc0] sm:$0xff] %v740
        %s768 = scalar_lea.vmem [#allocation5], %s741
        %769 = vst [vmem:[%s768] sm:$0xff] %v271
        %770 = vst [vmem:[%s768 + $0x8] sm:$0xff] %v272
        %771 = vst [vmem:[%s768 + $0x10] sm:$0xff] %v273
        %772 = vst [vmem:[%s768 + $0x18] sm:$0xff] %v274
        %773 = vst [vmem:[%s768 + $0x20] sm:$0xff] %v275
        %774 = vst [vmem:[%s768 + $0x28] sm:$0xff] %v276
        %775 = vst [vmem:[%s768 + $0x30] sm:$0xff] %v277
        %776 = vst [vmem:[%s768 + $0x38] sm:$0xff] %v278
        %777 = vst [vmem:[%s768 + $0x40] sm:$0xff] %v279
        %778 = vst [vmem:[%s768 + $0x48] sm:$0xff] %v280
        %779 = vst [vmem:[%s768 + $0x50] sm:$0xff] %v281
        %780 = vst [vmem:[%s768 + $0x58] sm:$0xff] %v282
        %781 = vst [vmem:[%s768 + $0x60] sm:$0xff] %v283
        %782 = vst [vmem:[%s768 + $0x68] sm:$0xff] %v284
        %783 = vst [vmem:[%s768 + $0x70] sm:$0xff] %v285
        %784 = vst [vmem:[%s768 + $0x78] sm:$0xff] %v286
        %785 = vst [vmem:[%s768 + $0x80] sm:$0xff] %v287
        %786 = vst [vmem:[%s768 + $0x88] sm:$0xff] %v288
        %787 = vst [vmem:[%s768 + $0x90] sm:$0xff] %v289
        %788 = vst [vmem:[%s768 + $0x98] sm:$0xff] %v290
        %789 = vst [vmem:[%s768 + $0xa0] sm:$0xff] %v291
        %790 = vst [vmem:[%s768 + $0xa8] sm:$0xff] %v292
        %791 = vst [vmem:[%s768 + $0xb0] sm:$0xff] %v293
        %792 = vst [vmem:[%s768 + $0xb8] sm:$0xff] %v294
        %793 = vst [vmem:[%s768 + $0xc0] sm:$0xff] %v295
        %v794 = vlaneseq
        %v795 = vshrl.u32 %v794, 7
        %v796 = vadd.s32 %v795, 8
        %v797 = vadd.s32 %v795, 16
        %v798 = vadd.s32 %v795, 24
        %v799 = vadd.s32 %v795, 32
        %v800 = vadd.s32 %v795, 40
        %v801 = vadd.s32 %v795, 48
        %v802 = vadd.s32 %v795, 56
        %v803 = vadd.s32 %v795, 64
        %v804 = vadd.s32 %v795, 72
        %v805 = vadd.s32 %v795, 80
        %v806 = vadd.s32 %v795, 88
        %v807 = vadd.s32 %v795, 96
        %v808 = vadd.s32 %v795, 104
        %v809 = vadd.s32 %v795, 112
        %v810 = vadd.s32 %v795, 120
        %v811 = vadd.s32 %v795, 128
        %v812 = vadd.s32 %v795, 136
        %v813 = vadd.s32 %v795, 144
        %v814 = vadd.s32 %v795, 152
        %v815 = vadd.s32 %v795, 160
        %v816 = vadd.s32 %v795, 168
        %v817 = vadd.s32 %v795, 176
        %v818 = vadd.s32 %v795, 184
        %v819 = vadd.s32 %v795, 192
        %v820 = vstv %s741
        %v821 = vadd.s32 %v795, %v820
        %v822 = vadd.s32 %v796, %v820
        %v823 = vadd.s32 %v797, %v820
        %v824 = vadd.s32 %v798, %v820
        %v825 = vadd.s32 %v799, %v820
        %v826 = vadd.s32 %v800, %v820
        %v827 = vadd.s32 %v801, %v820
        %v828 = vadd.s32 %v802, %v820
        %v829 = vadd.s32 %v803, %v820
        %v830 = vadd.s32 %v804, %v820
        %v831 = vadd.s32 %v805, %v820
        %v832 = vadd.s32 %v806, %v820
        %v833 = vadd.s32 %v807, %v820
        %v834 = vadd.s32 %v808, %v820
        %v835 = vadd.s32 %v809, %v820
        %v836 = vadd.s32 %v810, %v820
        %v837 = vadd.s32 %v811, %v820
        %v838 = vadd.s32 %v812, %v820
        %v839 = vadd.s32 %v813, %v820
        %v840 = vadd.s32 %v814, %v820
        %v841 = vadd.s32 %v815, %v820
        %v842 = vadd.s32 %v816, %v820
        %v843 = vadd.s32 %v817, %v820
        %v844 = vadd.s32 %v818, %v820
        %v845 = vadd.s32 %v819, %v820
        %vm846 = vcmp.lt.s32.totalorder %v821, 200
        %vm847 = vcmp.lt.s32.totalorder %v822, 200
        %vm848 = vcmp.lt.s32.totalorder %v823, 200
        %vm849 = vcmp.lt.s32.totalorder %v824, 200
        %vm850 = vcmp.lt.s32.totalorder %v825, 200
        %vm851 = vcmp.lt.s32.totalorder %v826, 200
        %vm852 = vcmp.lt.s32.totalorder %v827, 200
        %vm853 = vcmp.lt.s32.totalorder %v828, 200
        %vm854 = vcmp.lt.s32.totalorder %v829, 200
        %vm855 = vcmp.lt.s32.totalorder %v830, 200
        %vm856 = vcmp.lt.s32.totalorder %v831, 200
        %vm857 = vcmp.lt.s32.totalorder %v832, 200
        %vm858 = vcmp.lt.s32.totalorder %v833, 200
        %vm859 = vcmp.lt.s32.totalorder %v834, 200
        %vm860 = vcmp.lt.s32.totalorder %v835, 200
        %vm861 = vcmp.lt.s32.totalorder %v836, 200
        %vm862 = vcmp.lt.s32.totalorder %v837, 200
        %vm863 = vcmp.lt.s32.totalorder %v838, 200
        %vm864 = vcmp.lt.s32.totalorder %v839, 200
        %vm865 = vcmp.lt.s32.totalorder %v840, 200
        %vm866 = vcmp.lt.s32.totalorder %v841, 200
        %vm867 = vcmp.lt.s32.totalorder %v842, 200
        %vm868 = vcmp.lt.s32.totalorder %v843, 200
        %vm869 = vcmp.lt.s32.totalorder %v844, 200
        %vm870 = vcmp.lt.s32.totalorder %v845, 200
        %v871 = vsel %vm846, 1, 0
        %v872 = vsel %vm847, 1, 0
        %v873 = vsel %vm848, 1, 0
        %v874 = vsel %vm849, 1, 0
        %v875 = vsel %vm850, 1, 0
        %v876 = vsel %vm851, 1, 0
        %v877 = vsel %vm852, 1, 0
        %v878 = vsel %vm853, 1, 0
        %v879 = vsel %vm854, 1, 0
        %v880 = vsel %vm855, 1, 0
        %v881 = vsel %vm856, 1, 0
        %v882 = vsel %vm857, 1, 0
        %v883 = vsel %vm858, 1, 0
        %v884 = vsel %vm859, 1, 0
        %v885 = vsel %vm860, 1, 0
        %v886 = vsel %vm861, 1, 0
        %v887 = vsel %vm862, 1, 0
        %v888 = vsel %vm863, 1, 0
        %v889 = vsel %vm864, 1, 0
        %v890 = vsel %vm865, 1, 0
        %v891 = vsel %vm866, 1, 0
        %v892 = vsel %vm867, 1, 0
        %v893 = vsel %vm868, 1, 0
        %v894 = vsel %vm869, 1, 0
        %v895 = vsel %vm870, 1, 0
        %vm896 = vcmp.eq.s32.totalorder %v871, 1
        %vm897 = vcmp.eq.s32.totalorder %v872, 1
        %vm898 = vcmp.eq.s32.totalorder %v873, 1
        %vm899 = vcmp.eq.s32.totalorder %v874, 1
        %vm900 = vcmp.eq.s32.totalorder %v875, 1
        %vm901 = vcmp.eq.s32.totalorder %v876, 1
        %vm902 = vcmp.eq.s32.totalorder %v877, 1
        %vm903 = vcmp.eq.s32.totalorder %v878, 1
        %vm904 = vcmp.eq.s32.totalorder %v879, 1
        %vm905 = vcmp.eq.s32.totalorder %v880, 1
        %vm906 = vcmp.eq.s32.totalorder %v881, 1
        %vm907 = vcmp.eq.s32.totalorder %v882, 1
        %vm908 = vcmp.eq.s32.totalorder %v883, 1
        %vm909 = vcmp.eq.s32.totalorder %v884, 1
        %vm910 = vcmp.eq.s32.totalorder %v885, 1
        %vm911 = vcmp.eq.s32.totalorder %v886, 1
        %vm912 = vcmp.eq.s32.totalorder %v887, 1
        %vm913 = vcmp.eq.s32.totalorder %v888, 1
        %vm914 = vcmp.eq.s32.totalorder %v889, 1
        %vm915 = vcmp.eq.s32.totalorder %v890, 1
        %vm916 = vcmp.eq.s32.totalorder %v891, 1
        %vm917 = vcmp.eq.s32.totalorder %v892, 1
        %vm918 = vcmp.eq.s32.totalorder %v893, 1
        %vm919 = vcmp.eq.s32.totalorder %v894, 1
        %vm920 = vcmp.eq.s32.totalorder %v895, 1
        %v921 = vsel %vm896, %v716, 0.0
        %v922 = vsel %vm897, %v717, 0.0
        %v923 = vsel %vm898, %v718, 0.0
        %v924 = vsel %vm899, %v719, 0.0
        %v925 = vsel %vm900, %v720, 0.0
        %v926 = vsel %vm901, %v721, 0.0
        %v927 = vsel %vm902, %v722, 0.0
        %v928 = vsel %vm903, %v723, 0.0
        %v929 = vsel %vm904, %v724, 0.0
        %v930 = vsel %vm905, %v725, 0.0
        %v931 = vsel %vm906, %v726, 0.0
        %v932 = vsel %vm907, %v727, 0.0
        %v933 = vsel %vm908, %v728, 0.0
        %v934 = vsel %vm909, %v729, 0.0
        %v935 = vsel %vm910, %v730, 0.0
        %v936 = vsel %vm911, %v731, 0.0
        %v937 = vsel %vm912, %v732, 0.0
        %v938 = vsel %vm913, %v733, 0.0
        %v939 = vsel %vm914, %v734, 0.0
        %v940 = vsel %vm915, %v735, 0.0
        %v941 = vsel %vm916, %v736, 0.0
        %v942 = vsel %vm917, %v737, 0.0
        %v943 = vsel %vm918, %v738, 0.0
        %v944 = vsel %vm919, %v739, 0.0
        %v945 = vsel %vm920, %v740, 0.0
        %v946 = vld [vmem:[#allocation2] sm:$0x1]
        %v947 = vadd.f32 %v921, %v922
        %v948 = vadd.f32 %v947, %v923
        %v949 = vadd.f32 %v948, %v924
        %v950 = vadd.f32 %v949, %v925
        %v951 = vadd.f32 %v950, %v926
        %v952 = vadd.f32 %v951, %v927
        %v953 = vadd.f32 %v952, %v928
        %v954 = vadd.f32 %v953, %v929
        %v955 = vadd.f32 %v954, %v930
        %v956 = vadd.f32 %v955, %v931
        %v957 = vadd.f32 %v956, %v932
        %v958 = vadd.f32 %v957, %v933
        %v959 = vadd.f32 %v958, %v934
        %v960 = vadd.f32 %v959, %v935
        %v961 = vadd.f32 %v960, %v936
        %v962 = vadd.f32 %v961, %v937
        %v963 = vadd.f32 %v962, %v938
        %v964 = vadd.f32 %v963, %v939
        %v965 = vadd.f32 %v964, %v940
        %v966 = vadd.f32 %v965, %v941
        %v967 = vadd.f32 %v966, %v942
        %v968 = vadd.f32 %v967, %v943
        %v969 = vadd.f32 %v968, %v944
        %v970 = vadd.f32 %v969, %v945
        %v971 = vrot.slane %v970, 4
        %v972 = vadd.f32 %v970, %v971
        %v973 = vrot.slane %v972, 2
        %v974 = vadd.f32 %v972, %v973
        %v975 = vrot.slane %v974, 1
        %v976 = vadd.f32 %v974, %v975
        %v977 = vadd.f32 %v946, %v976
        %978 = vst [vmem:[#allocation2] sm:$0x1] %v977
        %v979 = vld [vmem:[#allocation3] sm:$0x1]
        %v980 = vmul.f32 %v921, %v921
        %v981 = vmul.f32 %v922, %v922
        %v982 = vmul.f32 %v923, %v923
        %v983 = vmul.f32 %v924, %v924
        %v984 = vmul.f32 %v925, %v925
        %v985 = vmul.f32 %v926, %v926
        %v986 = vmul.f32 %v927, %v927
        %v987 = vmul.f32 %v928, %v928
        %v988 = vmul.f32 %v929, %v929
        %v989 = vmul.f32 %v930, %v930
        %v990 = vmul.f32 %v931, %v931
        %v991 = vmul.f32 %v932, %v932
        %v992 = vmul.f32 %v933, %v933
        %v993 = vmul.f32 %v934, %v934
        %v994 = vmul.f32 %v935, %v935
        %v995 = vmul.f32 %v936, %v936
        %v996 = vmul.f32 %v937, %v937
        %v997 = vmul.f32 %v938, %v938
        %v998 = vmul.f32 %v939, %v939
        %v999 = vmul.f32 %v940, %v940
        %v1000 = vmul.f32 %v941, %v941
        %v1001 = vmul.f32 %v942, %v942
        %v1002 = vmul.f32 %v943, %v943
        %v1003 = vmul.f32 %v944, %v944
        %v1004 = vmul.f32 %v945, %v945
        %v1005 = vadd.f32 %v980, %v981
        %v1006 = vadd.f32 %v1005, %v982
        %v1007 = vadd.f32 %v1006, %v983
        %v1008 = vadd.f32 %v1007, %v984
        %v1009 = vadd.f32 %v1008, %v985
        %v1010 = vadd.f32 %v1009, %v986
        %v1011 = vadd.f32 %v1010, %v987
        %v1012 = vadd.f32 %v1011, %v988
        %v1013 = vadd.f32 %v1012, %v989
        %v1014 = vadd.f32 %v1013, %v990
        %v1015 = vadd.f32 %v1014, %v991
        %v1016 = vadd.f32 %v1015, %v992
        %v1017 = vadd.f32 %v1016, %v993
        %v1018 = vadd.f32 %v1017, %v994
        %v1019 = vadd.f32 %v1018, %v995
        %v1020 = vadd.f32 %v1019, %v996
        %v1021 = vadd.f32 %v1020, %v997
        %v1022 = vadd.f32 %v1021, %v998
        %v1023 = vadd.f32 %v1022, %v999
        %v1024 = vadd.f32 %v1023, %v1000
        %v1025 = vadd.f32 %v1024, %v1001
        %v1026 = vadd.f32 %v1025, %v1002
        %v1027 = vadd.f32 %v1026, %v1003
        %v1028 = vadd.f32 %v1027, %v1004
        %v1029 = vrot.slane %v1028, 4
        %v1030 = vadd.f32 %v1028, %v1029
        %v1031 = vrot.slane %v1030, 2
        %v1032 = vadd.f32 %v1030, %v1031
        %v1033 = vrot.slane %v1032, 1
        %v1034 = vadd.f32 %v1032, %v1033
        %v1035 = vadd.f32 %v979, %v1034
        %1036 = vst [vmem:[#allocation3] sm:$0x1] %v1035
        // Predicated region
        $region49: #{_resblock_forward_impl.1} parent=47 // pred_check
          %p1037 = pneg %p261
        $region50: #{_resblock_forward_impl.1} parent=47 // pred_check_branch
          %1039 = sbr.rel (%p1037) target = $region52
        $region51: #{_resblock_forward_impl.1} parent=47 // pred_region
          %v1040 = vld [vmem:[#allocation2] sm:$0x1]
          %v1041 = vmul.f32 %v1040, 0.005
          %v1042 = vld [vmem:[#allocation3] sm:$0x1]
          %v1043 = vmul.f32 %v1042, 0.005
          %v1044 = vmul.f32 %v1041, %v1041
          %v1045 = vsub.f32 %v1043, %v1044
          %v1046 = vmax.f32 %v1045, 0.0
          %v1047 = vadd.f32 %v1046, 1e-05
          %v1048 = vrsqrt.pop %v1047
          %v1049 = vld [vmem:[%s3] sm:$0x1]
          %v1050 = vmul.f32 %v1049, %v1048
          %v1051 = vld [vmem:[%s4] sm:$0x1]
          %v1052 = vmul.f32 %v1041, %v1050
          %v1053 = vsub.f32 %v1051, %v1052
          %1054 = vst [vmem:[#allocation2] sm:$0x1] %v1050
          %1055 = vst [vmem:[#allocation3] sm:$0x1] %v1053
        $region52: #{_resblock_forward_impl.1} parent=47 // pred_fallthru
          _
      $region48: #{_resblock_forward_impl.1} parent=39 // pred_fallthru
        _
      %p1056 = scmp.eq.s32.totalorder %s20, 1
      // Predicated region
      $region53: #{_resblock_forward_impl.1} parent=39 // pred_check
        %p1057 = pneg %p1056
      $region54: #{_resblock_forward_impl.1} parent=39 // pred_check_branch
        %1059 = sbr.rel (%p1057) target = $region56
      $region55: #{_resblock_forward_impl.1} parent=39 // pred_region
        %s1060 = smul.u32 %s21, 200
        %s1061 = scalar_lea.vmem [#allocation4], %s1060
        %v1062 = vld [vmem:[%s1061] sm:$0xff]
        %v1063 = vld [vmem:[%s1061 + $0x8] sm:$0xff]
        %v1064 = vld [vmem:[%s1061 + $0x10] sm:$0xff]
        %v1065 = vld [vmem:[%s1061 + $0x18] sm:$0xff]
        %v1066 = vld [vmem:[%s1061 + $0x20] sm:$0xff]
        %v1067 = vld [vmem:[%s1061 + $0x28] sm:$0xff]
        %v1068 = vld [vmem:[%s1061 + $0x30] sm:$0xff]
        %v1069 = vld [vmem:[%s1061 + $0x38] sm:$0xff]
        %v1070 = vld [vmem:[%s1061 + $0x40] sm:$0xff]
        %v1071 = vld [vmem:[%s1061 + $0x48] sm:$0xff]
        %v1072 = vld [vmem:[%s1061 + $0x50] sm:$0xff]
        %v1073 = vld [vmem:[%s1061 + $0x58] sm:$0xff]
        %v1074 = vld [vmem:[%s1061 + $0x60] sm:$0xff]
        %v1075 = vld [vmem:[%s1061 + $0x68] sm:$0xff]
        %v1076 = vld [vmem:[%s1061 + $0x70] sm:$0xff]
        %v1077 = vld [vmem:[%s1061 + $0x78] sm:$0xff]
        %v1078 = vld [vmem:[%s1061 + $0x80] sm:$0xff]
        %v1079 = vld [vmem:[%s1061 + $0x88] sm:$0xff]
        %v1080 = vld [vmem:[%s1061 + $0x90] sm:$0xff]
        %v1081 = vld [vmem:[%s1061 + $0x98] sm:$0xff]
        %v1082 = vld [vmem:[%s1061 + $0xa0] sm:$0xff]
        %v1083 = vld [vmem:[%s1061 + $0xa8] sm:$0xff]
        %v1084 = vld [vmem:[%s1061 + $0xb0] sm:$0xff]
        %v1085 = vld [vmem:[%s1061 + $0xb8] sm:$0xff]
        %v1086 = vld [vmem:[%s1061 + $0xc0] sm:$0xff]
        %s1087 = scalar_lea.vmem [#allocation5], %s1060
        %v1088 = vld [vmem:[%s1087] sm:$0xff]
        %v1089 = vld [vmem:[%s1087 + $0x8] sm:$0xff]
        %v1090 = vld [vmem:[%s1087 + $0x10] sm:$0xff]
        %v1091 = vld [vmem:[%s1087 + $0x18] sm:$0xff]
        %v1092 = vld [vmem:[%s1087 + $0x20] sm:$0xff]
        %v1093 = vld [vmem:[%s1087 + $0x28] sm:$0xff]
        %v1094 = vld [vmem:[%s1087 + $0x30] sm:$0xff]
        %v1095 = vld [vmem:[%s1087 + $0x38] sm:$0xff]
        %v1096 = vld [vmem:[%s1087 + $0x40] sm:$0xff]
        %v1097 = vld [vmem:[%s1087 + $0x48] sm:$0xff]
        %v1098 = vld [vmem:[%s1087 + $0x50] sm:$0xff]
        %v1099 = vld [vmem:[%s1087 + $0x58] sm:$0xff]
        %v1100 = vld [vmem:[%s1087 + $0x60] sm:$0xff]
        %v1101 = vld [vmem:[%s1087 + $0x68] sm:$0xff]
        %v1102 = vld [vmem:[%s1087 + $0x70] sm:$0xff]
        %v1103 = vld [vmem:[%s1087 + $0x78] sm:$0xff]
        %v1104 = vld [vmem:[%s1087 + $0x80] sm:$0xff]
        %v1105 = vld [vmem:[%s1087 + $0x88] sm:$0xff]
        %v1106 = vld [vmem:[%s1087 + $0x90] sm:$0xff]
        %v1107 = vld [vmem:[%s1087 + $0x98] sm:$0xff]
        %v1108 = vld [vmem:[%s1087 + $0xa0] sm:$0xff]
        %v1109 = vld [vmem:[%s1087 + $0xa8] sm:$0xff]
        %v1110 = vld [vmem:[%s1087 + $0xb0] sm:$0xff]
        %v1111 = vld [vmem:[%s1087 + $0xb8] sm:$0xff]
        %v1112 = vld [vmem:[%s1087 + $0xc0] sm:$0xff]
        %v1113 = vld [vmem:[#allocation2] sm:$0x1]
        %v1115 = vlaneseq
        %v1116 = vshrl.u32 %v1115, 7
        %v1117 = vsub.s32 0, %v1116
        %v1118 = vrot.slane %v1113, %v1117
        %v1120 = vmul.f32 %v1062, %v1118
        %v1121 = vmul.f32 %v1063, %v1118
        %v1122 = vmul.f32 %v1064, %v1118
        %v1123 = vmul.f32 %v1065, %v1118
        %v1124 = vmul.f32 %v1066, %v1118
        %v1125 = vmul.f32 %v1067, %v1118
        %v1126 = vmul.f32 %v1068, %v1118
        %v1127 = vmul.f32 %v1069, %v1118
        %v1128 = vmul.f32 %v1070, %v1118
        %v1129 = vmul.f32 %v1071, %v1118
        %v1130 = vmul.f32 %v1072, %v1118
        %v1131 = vmul.f32 %v1073, %v1118
        %v1132 = vmul.f32 %v1074, %v1118
        %v1133 = vmul.f32 %v1075, %v1118
        %v1134 = vmul.f32 %v1076, %v1118
        %v1135 = vmul.f32 %v1077, %v1118
        %v1136 = vmul.f32 %v1078, %v1118
        %v1137 = vmul.f32 %v1079, %v1118
        %v1138 = vmul.f32 %v1080, %v1118
        %v1139 = vmul.f32 %v1081, %v1118
        %v1140 = vmul.f32 %v1082, %v1118
        %v1141 = vmul.f32 %v1083, %v1118
        %v1142 = vmul.f32 %v1084, %v1118
        %v1143 = vmul.f32 %v1085, %v1118
        %v1144 = vmul.f32 %v1086, %v1118
        %v1145 = vld [vmem:[#allocation3] sm:$0x1]
        %v1147 = vlaneseq
        %v1148 = vshrl.u32 %v1147, 7
        %v1149 = vsub.s32 0, %v1148
        %v1150 = vrot.slane %v1145, %v1149
        %v1152 = vadd.f32 %v1120, %v1150
        %v1153 = vadd.f32 %v1121, %v1150
        %v1154 = vadd.f32 %v1122, %v1150
        %v1155 = vadd.f32 %v1123, %v1150
        %v1156 = vadd.f32 %v1124, %v1150
        %v1157 = vadd.f32 %v1125, %v1150
        %v1158 = vadd.f32 %v1126, %v1150
        %v1159 = vadd.f32 %v1127, %v1150
        %v1160 = vadd.f32 %v1128, %v1150
        %v1161 = vadd.f32 %v1129, %v1150
        %v1162 = vadd.f32 %v1130, %v1150
        %v1163 = vadd.f32 %v1131, %v1150
        %v1164 = vadd.f32 %v1132, %v1150
        %v1165 = vadd.f32 %v1133, %v1150
        %v1166 = vadd.f32 %v1134, %v1150
        %v1167 = vadd.f32 %v1135, %v1150
        %v1168 = vadd.f32 %v1136, %v1150
        %v1169 = vadd.f32 %v1137, %v1150
        %v1170 = vadd.f32 %v1138, %v1150
        %v1171 = vadd.f32 %v1139, %v1150
        %v1172 = vadd.f32 %v1140, %v1150
        %v1173 = vadd.f32 %v1141, %v1150
        %v1174 = vadd.f32 %v1142, %v1150
        %v1175 = vadd.f32 %v1143, %v1150
        %v1176 = vadd.f32 %v1144, %v1150
        %v1177 = vadd.f32 %v1152, %v1088
        %v1178 = vadd.f32 %v1153, %v1089
        %v1179 = vadd.f32 %v1154, %v1090
        %v1180 = vadd.f32 %v1155, %v1091
        %v1181 = vadd.f32 %v1156, %v1092
        %v1182 = vadd.f32 %v1157, %v1093
        %v1183 = vadd.f32 %v1158, %v1094
        %v1184 = vadd.f32 %v1159, %v1095
        %v1185 = vadd.f32 %v1160, %v1096
        %v1186 = vadd.f32 %v1161, %v1097
        %v1187 = vadd.f32 %v1162, %v1098
        %v1188 = vadd.f32 %v1163, %v1099
        %v1189 = vadd.f32 %v1164, %v1100
        %v1190 = vadd.f32 %v1165, %v1101
        %v1191 = vadd.f32 %v1166, %v1102
        %v1192 = vadd.f32 %v1167, %v1103
        %v1193 = vadd.f32 %v1168, %v1104
        %v1194 = vadd.f32 %v1169, %v1105
        %v1195 = vadd.f32 %v1170, %v1106
        %v1196 = vadd.f32 %v1171, %v1107
        %v1197 = vadd.f32 %v1172, %v1108
        %v1198 = vadd.f32 %v1173, %v1109
        %v1199 = vadd.f32 %v1174, %v1110
        %v1200 = vadd.f32 %v1175, %v1111
        %v1201 = vadd.f32 %v1176, %v1112
        %1202 = vst [vmem:[%s256] sm:$0xff] %v1177
        %1203 = vst [vmem:[%s256 + $0x8] sm:$0xff] %v1178
        %1204 = vst [vmem:[%s256 + $0x10] sm:$0xff] %v1179
        %1205 = vst [vmem:[%s256 + $0x18] sm:$0xff] %v1180
        %1206 = vst [vmem:[%s256 + $0x20] sm:$0xff] %v1181
        %1207 = vst [vmem:[%s256 + $0x28] sm:$0xff] %v1182
        %1208 = vst [vmem:[%s256 + $0x30] sm:$0xff] %v1183
        %1209 = vst [vmem:[%s256 + $0x38] sm:$0xff] %v1184
        %1210 = vst [vmem:[%s256 + $0x40] sm:$0xff] %v1185
        %1211 = vst [vmem:[%s256 + $0x48] sm:$0xff] %v1186
        %1212 = vst [vmem:[%s256 + $0x50] sm:$0xff] %v1187
        %1213 = vst [vmem:[%s256 + $0x58] sm:$0xff] %v1188
        %1214 = vst [vmem:[%s256 + $0x60] sm:$0xff] %v1189
        %1215 = vst [vmem:[%s256 + $0x68] sm:$0xff] %v1190
        %1216 = vst [vmem:[%s256 + $0x70] sm:$0xff] %v1191
        %1217 = vst [vmem:[%s256 + $0x78] sm:$0xff] %v1192
        %1218 = vst [vmem:[%s256 + $0x80] sm:$0xff] %v1193
        %1219 = vst [vmem:[%s256 + $0x88] sm:$0xff] %v1194
        %1220 = vst [vmem:[%s256 + $0x90] sm:$0xff] %v1195
        %1221 = vst [vmem:[%s256 + $0x98] sm:$0xff] %v1196
        %1222 = vst [vmem:[%s256 + $0xa0] sm:$0xff] %v1197
        %1223 = vst [vmem:[%s256 + $0xa8] sm:$0xff] %v1198
        %1224 = vst [vmem:[%s256 + $0xb0] sm:$0xff] %v1199
        %1225 = vst [vmem:[%s256 + $0xb8] sm:$0xff] %v1200
        %1226 = vst [vmem:[%s256 + $0xc0] sm:$0xff] %v1201
      $region56: #{_resblock_forward_impl.1} parent=39 // pred_fallthru
        _
      %s1227 = smul.u32 %s21, %s20
      %s1228 = smul.u32 25, %s1227
      %p1229 = scmp.lt.s32.totalorder %s1228, 24
      %s1230 = scalar_select %p1229, %s1228, 24
      %s1231 = smul.addr %s1230, 8
      %s1232 = scalar_lea.vmem %s5, %s1231
      // Predicated region
      $region57: #{_resblock_forward_impl.1} parent=39 // pred_check
        %p1233 = pneg %p162
      $region58: #{_resblock_forward_impl.1} parent=39 // pred_check_branch
        %1235 = sbr.rel (%p1233) target = $region60
      $region59: #{_resblock_forward_impl.1} parent=39 // pred_region
        %s1236 = smul.u32 %s21, %s20
        %s1237 = smul.u32 25, %s1236
      $region60: #{_resblock_forward_impl.1} parent=39 // pred_fallthru
        _
    $region40: #{_resblock_forward_impl.1} parent=5 // pred_fallthru
      _
    %p1238 = scmp.le.s32.totalorder 2, %s11
    // Predicated region
    $region61: #{_resblock_forward_impl.1} parent=5 // pred_check
      %p1239 = pneg %p1238
    $region62: #{_resblock_forward_impl.1} parent=5 // pred_check_branch
      %1241 = sbr.rel (%p1239) target = $region64
    $region63: #{_resblock_forward_impl.1} parent=5 // pred_region
      %s1242 = ssub.s32 %s11, 2
      // Predicated region
      $region65: #{_resblock_forward_impl.1} parent=63 // pred_check
        %p1243 = pneg %p168
      $region66: #{_resblock_forward_impl.1} parent=63 // pred_check_branch
        %1245 = sbr.rel (%p1243) target = $region68
      $region67: #{_resblock_forward_impl.1} parent=63 // pred_region
        %s1246 = smul.u32 %s23, %s22
        %s1247 = smul.u32 25, %s1246
        %p1248 = scmp.lt.s32.totalorder %s1247, 24
        %s1249 = scalar_select %p1248, %s1247, 24
        %s1250 = smul.addr %s1249, 8
        %s1251 = scalar_lea.vmem %s5, %s1250
      $region68: #{_resblock_forward_impl.1} parent=63 // pred_fallthru
        _
    $region64: #{_resblock_forward_impl.1} parent=5 // pred_fallthru
      _
  $region6: #{_resblock_forward_impl.1} parent=0 // loop_footer
    %s15 = sadd.s32 1, %s11
  $region7: #{_resblock_forward_impl.1} parent=0 // loop_footer_branch
    %10 = sbr.rel target = $region3
  $region8: #{_resblock_forward_impl.1} parent=0 // loop_exit
    _

</llo_original>
